<compile_context>
chip_gen: v7x
topology: tpu7x:2x2x1
jax: 0.10.0
libtpu: 0.0.40
codegen_flags: <defaults>
</compile_context>

<pallas_src>
import math
import functools

import jax
import jax.numpy as jnp
from jax import lax
from jax.experimental import pallas as pl
from jax.experimental.pallas import tpu as pltpu

VMEM_LIMIT = 32 * 1024 * 1024  # explicit scoped-VMEM budget (safe on v5e/v6e/v7x)


# =============================================================================
# Kernel 1: rmsnorm + per-head QKV projection (bf16 MXU) + rotary via roll
#   grid = (B, T//TQ, n_head), all parallel
# =============================================================================
def _qkv_rotary_kernel(x_ref, cos_ref, sin_ref, wq_ref, wk_ref, wv_ref,
                       q_ref, k_ref, v_ref, *, hd2):
    x = x_ref[0]                                                # (TQ, C) f32
    xn = (x * lax.rsqrt(jnp.mean(x * x, axis=-1, keepdims=True) + 1e-6)
          ).astype(jnp.bfloat16)
    cos = cos_ref[...]                                          # (TQ, hd) f32
    sin = sin_ref[...]                                          # (TQ, hd) f32, 2nd half negated

    q = jnp.dot(xn, wq_ref[0], preferred_element_type=jnp.float32)   # (TQ, hd)
    k = jnp.dot(xn, wk_ref[0], preferred_element_type=jnp.float32)
    v = jnp.dot(xn, wv_ref[0], preferred_element_type=jnp.float32)

    # rotary: y = x*cos + swap_halves(x)*sin_signed ; half-swap is an XLU roll
    q_rot = q * cos + pltpu.roll(q, shift=hd2, axis=1) * sin
    k_rot = k * cos + pltpu.roll(k, shift=hd2, axis=1) * sin

    q_ref[0, 0] = q_rot.astype(jnp.bfloat16)
    k_ref[0, 0] = k_rot.astype(jnp.bfloat16)
    v_ref[0, 0] = v.astype(jnp.bfloat16)


def qkv_rotary(x, cos_t, sin_t, wq_h, wk_h, wv_h, *, tq):
    B, T, C = x.shape
    n_head, _, hd = wq_h.shape
    nq = T // tq
    kern = functools.partial(_qkv_rotary_kernel, hd2=hd // 2)
    out = jax.ShapeDtypeStruct((B, n_head, T, hd), jnp.bfloat16)
    return pl.pallas_call(
        kern,
        out_shape=(out, out, out),
        grid_spec=pltpu.PrefetchScalarGridSpec(
            num_scalar_prefetch=0,
            grid=(B, nq, n_head),
            in_specs=[
                pl.BlockSpec((1, tq, C), lambda b, i, h: (b, i, 0)),
                pl.BlockSpec((tq, hd), lambda b, i, h: (i, 0)),
                pl.BlockSpec((tq, hd), lambda b, i, h: (i, 0)),
                pl.BlockSpec((1, C, hd), lambda b, i, h: (h, 0, 0)),
                pl.BlockSpec((1, C, hd), lambda b, i, h: (h, 0, 0)),
                pl.BlockSpec((1, C, hd), lambda b, i, h: (h, 0, 0)),
            ],
            out_specs=[
                pl.BlockSpec((1, 1, tq, hd), lambda b, i, h: (b, h, i, 0)),
                pl.BlockSpec((1, 1, tq, hd), lambda b, i, h: (b, h, i, 0)),
                pl.BlockSpec((1, 1, tq, hd), lambda b, i, h: (b, h, i, 0)),
            ],
        ),
        compiler_params=pltpu.CompilerParams(
            dimension_semantics=("parallel", "parallel", "parallel"),
            vmem_limit_bytes=VMEM_LIMIT),
    )(x, cos_t, sin_t, wq_h, wk_h, wv_h)


# =============================================================================
# Kernel 2: flash attention (online softmax over KV tiles, causal tile skip,
#           heads batched in-block)     grid = (B, T//TQ, T//TK)
# =============================================================================
def _flash_attn_kernel(q_ref, k_ref, v_ref, o_ref, m_sc, l_sc, acc_sc,
                       *, tq, tk, sm_scale):
    qi = pl.program_id(1)
    ki = pl.program_id(2)
    q0 = qi * tq
    k0 = ki * tk

    @pl.when(ki == 0)
    def _():
        m_sc[...] = jnp.full_like(m_sc, -jnp.inf)
        l_sc[...] = jnp.zeros_like(l_sc)
        acc_sc[...] = jnp.zeros_like(acc_sc)

    # causal: skip KV tiles entirely above the diagonal
    @pl.when(k0 <= q0 + tq - 1)
    def _():
        q = q_ref[0]                                            # (H, TQ, hd) bf16
        k = k_ref[0]                                            # (H, TK, hd) bf16
        v = v_ref[0]                                            # (H, TK, hd) bf16
        s = jnp.einsum("hqd,hkd->hqk", q, k,
                       preferred_element_type=jnp.float32) * sm_scale
        # tile-local causal mask (TQ, TK) — never a full (T, T) tensor
        rows = q0 + lax.broadcasted_iota(jnp.int32, (tq, tk), 0)
        cols = k0 + lax.broadcasted_iota(jnp.int32, (tq, tk), 1)
        s = jnp.where((rows >= cols)[None], s, -1e30)

        m_prev = m_sc[...]
        m_new = jnp.maximum(m_prev, jnp.max(s, axis=-1, keepdims=True))
        alpha = jnp.exp(m_prev - m_new)
        p = jnp.exp(s - m_new)
        l_sc[...] = alpha * l_sc[...] + jnp.sum(p, axis=-1, keepdims=True)
        acc_sc[...] = alpha * acc_sc[...] + jnp.einsum(
            "hqk,hkd->hqd", p.astype(jnp.bfloat16), v,
            preferred_element_type=jnp.float32)
        m_sc[...] = m_new

    @pl.when(ki == pl.num_programs(2) - 1)
    def _():
        o_ref[0] = (acc_sc[...] * pl.reciprocal(l_sc[...], approx=True)
                    ).astype(o_ref.dtype)


def flash_attention(q, k, v, *, tq, tk):
    B, H, T, hd = q.shape
    nq, nk = T // tq, T // tk
    kern = functools.partial(_flash_attn_kernel, tq=tq, tk=tk,
                             sm_scale=1.0 / math.sqrt(hd))
    return pl.pallas_call(
        kern,
        out_shape=jax.ShapeDtypeStruct((B, H, T, hd), jnp.bfloat16),
        grid_spec=pltpu.PrefetchScalarGridSpec(
            num_scalar_prefetch=0,
            grid=(B, nq, nk),
            in_specs=[
                pl.BlockSpec((1, H, tq, hd), lambda b, i, j: (b, 0, i, 0)),
                pl.BlockSpec((1, H, tk, hd), lambda b, i, j: (b, 0, j, 0)),
                pl.BlockSpec((1, H, tk, hd), lambda b, i, j: (b, 0, j, 0)),
            ],
            out_specs=pl.BlockSpec((1, H, tq, hd), lambda b, i, j: (b, 0, i, 0)),
            scratch_shapes=[
                pltpu.VMEM((H, tq, 1), jnp.float32),
                pltpu.VMEM((H, tq, 1), jnp.float32),
                pltpu.VMEM((H, tq, hd), jnp.float32),
            ],
        ),
        compiler_params=pltpu.CompilerParams(
            dimension_semantics=("parallel", "parallel", "arbitrary"),
            vmem_limit_bytes=VMEM_LIMIT),
    )(q, k, v)


# =============================================================================
# Kernel 3: attention output projection (reduction over heads) + residual
#   grid = (B, T//TQ, n_head) with head axis as the reduction ("arbitrary")
# =============================================================================
def _attn_proj_kernel(y_ref, x_ref, wp_ref, o_ref, acc_ref, *, attn_scale):
    h = pl.program_id(2)

    @pl.when(h == 0)
    def _():
        acc_ref[...] = jnp.zeros_like(acc_ref)

    acc_ref[...] += jnp.dot(y_ref[0, 0], wp_ref[0],
                            preferred_element_type=jnp.float32)

    @pl.when(h == pl.num_programs(2) - 1)
    def _():
        o_ref[0] = x_ref[0] + attn_scale * acc_ref[...]


def attn_proj_residual(y, x, waproj_h, *, attn_scale, tq):
    B, T, C = x.shape
    H, hd, _ = waproj_h.shape
    nq = T // tq
    kern = functools.partial(_attn_proj_kernel, attn_scale=attn_scale)
    return pl.pallas_call(
        kern,
        out_shape=jax.ShapeDtypeStruct((B, T, C), jnp.float32),
        grid_spec=pltpu.PrefetchScalarGridSpec(
            num_scalar_prefetch=0,
            grid=(B, nq, H),
            in_specs=[
                pl.BlockSpec((1, 1, tq, hd), lambda b, i, h: (b, h, i, 0)),
                pl.BlockSpec((1, tq, C), lambda b, i, h: (b, i, 0)),
                pl.BlockSpec((1, hd, C), lambda b, i, h: (h, 0, 0)),
            ],
            out_specs=pl.BlockSpec((1, tq, C), lambda b, i, h: (b, i, 0)),
            scratch_shapes=[pltpu.VMEM((tq, C), jnp.float32)],
        ),
        compiler_params=pltpu.CompilerParams(
            dimension_semantics=("parallel", "parallel", "arbitrary"),
            vmem_limit_bytes=VMEM_LIMIT),
    )(y, x, waproj_h)


# =============================================================================
# Kernel 4: rmsnorm + MLP (hidden dim 4C tiled, accumulated) + residual
#   grid = (B, T//TQ, 4C//TH) with hidden-tile axis as the reduction
# =============================================================================
def _mlp_kernel(x_ref, wfc_ref, wproj_ref, o_ref, acc_ref):
    ht = pl.program_id(2)
    x = x_ref[0]                                                # (TQ, C) f32

    @pl.when(ht == 0)
    def _():
        acc_ref[...] = jnp.zeros_like(acc_ref)

    xn = (x * lax.rsqrt(jnp.mean(x * x, axis=-1, keepdims=True) + 1e-6)
          ).astype(jnp.bfloat16)
    hfc = jnp.dot(xn, wfc_ref[...], preferred_element_type=jnp.float32)  # (TQ, TH)
    hact = jax.nn.gelu(hfc, approximate=False).astype(jnp.bfloat16)      # exact erf GELU (module default)
    acc_ref[...] += jnp.dot(hact, wproj_ref[...],
                            preferred_element_type=jnp.float32)

    @pl.when(ht == pl.num_programs(2) - 1)
    def _():
        o_ref[0] = x + acc_ref[...]


def mlp_residual(x, w_fc, w_mproj, *, tq, th):
    B, T, C = x.shape
    H4 = w_fc.shape[1]
    nq, nh = T // tq, H4 // th
    return pl.pallas_call(
        _mlp_kernel,
        out_shape=jax.ShapeDtypeStruct((B, T, C), jnp.float32),
        grid_spec=pltpu.PrefetchScalarGridSpec(
            num_scalar_prefetch=0,
            grid=(B, nq, nh),
            in_specs=[
                pl.BlockSpec((1, tq, C), lambda b, i, t: (b, i, 0)),
                pl.BlockSpec((C, th), lambda b, i, t: (0, t)),
                pl.BlockSpec((th, C), lambda b, i, t: (t, 0)),
            ],
            out_specs=pl.BlockSpec((1, tq, C), lambda b, i, t: (b, i, 0)),
            scratch_shapes=[pltpu.VMEM((tq, C), jnp.float32)],
        ),
        compiler_params=pltpu.CompilerParams(
            dimension_semantics=("parallel", "parallel", "arbitrary"),
            vmem_limit_bytes=VMEM_LIMIT),
    )(x, w_fc, w_mproj)


# =============================================================================
# Kernel 5: final rmsnorm + lm_head (last token only), vocab tiled
# =============================================================================
def _lm_head_kernel(x_ref, w_ref, o_ref):
    x = x_ref[...]                                              # (B, C) f32
    xn = (x * lax.rsqrt(jnp.mean(x * x, axis=-1, keepdims=True) + 1e-6)
          ).astype(jnp.bfloat16)
    o_ref[...] = jnp.dot(xn, w_ref[...], preferred_element_type=jnp.float32)


def lm_head(x_last, w_lm, *, tv):
    B, C = x_last.shape
    V = w_lm.shape[1]
    nv = V // tv
    return pl.pallas_call(
        _lm_head_kernel,
        out_shape=jax.ShapeDtypeStruct((B, V), jnp.float32),
        grid_spec=pltpu.PrefetchScalarGridSpec(
            num_scalar_prefetch=0,
            grid=(nv,),
            in_specs=[
                pl.BlockSpec((B, C), lambda j: (0, 0)),
                pl.BlockSpec((C, tv), lambda j: (0, j)),
            ],
            out_specs=pl.BlockSpec((B, tv), lambda j: (0, j)),
        ),
        compiler_params=pltpu.CompilerParams(
            dimension_semantics=("parallel",),
            vmem_limit_bytes=VMEM_LIMIT),
    )(x_last, w_lm)


# =============================================================================
# Block / GPT composition
# =============================================================================
def block_forward(x, cos_t, sin_t, kp, *, attn_scale, tq, tk, th):
    q, k, v = qkv_rotary(x, cos_t, sin_t, kp["wq_h"], kp["wk_h"], kp["wv_h"], tq=tq)
    y = flash_attention(q, k, v, tq=tq, tk=tk)
    x1 = attn_proj_residual(y, x, kp["waproj_h"], attn_scale=attn_scale, tq=tq)
    return mlp_residual(x1, kp["w_fc"], kp["w_mproj"], tq=tq, th=th)


def gpt_forward(idx, wte, layer_kparams, cos_t, sin_t, w_lm_bf16, *,
                attn_scale, tq, tk, th, tv):
    # TODO(synk): token-embedding gather stays in XLA (data-dependent gather has no
    # clean rectangular-BlockSpec equivalent; would need a manual DMA-gather kernel).
    x = jnp.take(wte, idx, axis=0).astype(jnp.float32)
    for kp in layer_kparams:
        x = block_forward(x, cos_t, sin_t, kp,
                          attn_scale=attn_scale, tq=tq, tk=tk, th=th)
    logits = lm_head(x[:, -1, :], w_lm_bf16, tv=tv)
    return logits[:, None, :]          # (B, 1, V) — matches GPT.forward(targets=None)


# =============================================================================
# Pure-JAX f32 reference (mirrors the PyTorch module)
# =============================================================================
def _rmsnorm_ref(x, eps=1e-6):
    return x * lax.rsqrt(jnp.mean(x * x, axis=-1, keepdims=True) + eps)


def _block_ref(x, p, cos, sin, n_head, attn_scale):
    B, T, C = x.shape
    hd = C // n_head
    hd2 = hd // 2
    xn = _rmsnorm_ref(x)
    q = (xn @ p["w_q"]).reshape(B, T, n_head, hd)
    k = (xn @ p["w_k"]).reshape(B, T, n_head, hd)
    v = (xn @ p["w_v"]).reshape(B, T, n_head, hd)
    c = cos[None, :, None, :]
    s = sin[None, :, None, :]

    def rot(a):
        a1, a2 = a[..., :hd2], a[..., hd2:]
        return jnp.concatenate([a1 * c + a2 * s, -a1 * s + a2 * c], axis=-1)

    q, k = rot(q), rot(k)
    q, k, v = (t.transpose(0, 2, 1, 3) for t in (q, k, v))
    scores = jnp.einsum("bhqd,bhkd->bhqk", q, k) / math.sqrt(hd)
    mask = jnp.tril(jnp.ones((T, T), bool))
    scores = jnp.where(mask, scores, -jnp.inf)
    pattn = jax.nn.softmax(scores, axis=-1)
    y = jnp.einsum("bhqk,bhkd->bhqd", pattn, v)
    y = y.transpose(0, 2, 1, 3).reshape(B, T, C)
    x = x + attn_scale * (y @ p["w_aproj"])
    h = jax.nn.gelu(_rmsnorm_ref(x) @ p["w_fc"], approximate=False)
    return x + h @ p["w_mproj"]


def _gpt_ref(idx, wte, layer_params, cos, sin, n_head, attn_scale):
    x = wte[idx]
    for p in layer_params:
        x = _block_ref(x, p, cos, sin, n_head, attn_scale)
    x = _rmsnorm_ref(x)
    return x[:, -1, :] @ wte.T


# =============================================================================
# main
# =============================================================================
if __name__ == "__main__":
    # small, TPU-tile-aligned config
    B, T, C, n_head, n_layer, V = 2, 128, 256, 2, 2, 512
    hd = C // n_head          # 128 (lane-native head dim)
    hd2 = hd // 2
    attn_scale = 1.0 / math.sqrt(2 * n_layer)
    TQ, TK = 64, 64           # sequence tiles
    TH = 512                  # tile of the 4C = 1024 MLP hidden dim
    TV = 256                  # vocab tile for lm_head

    key = jax.random.PRNGKey(0)
    key, kw, kidx = jax.random.split(key, 3)
    wte = 0.02 * jax.random.normal(kw, (V, C), jnp.float32)
    idx = jax.random.randint(kidx, (B, T), 0, V)

    layer_params = []
    for _ in range(n_layer):
        key, k1, k2, k3, k4, k5, k6 = jax.random.split(key, 7)
        layer_params.append(dict(
            w_q=0.02 * jax.random.normal(k1, (C, C), jnp.float32),
            w_k=0.02 * jax.random.normal(k2, (C, C), jnp.float32),
            w_v=0.02 * jax.random.normal(k3, (C, C), jnp.float32),
            w_aproj=0.02 * jax.random.normal(k4, (C, C), jnp.float32),
            w_fc=0.02 * jax.random.normal(k5, (C, 4 * C), jnp.float32),
            w_mproj=0.02 * jax.random.normal(k6, (4 * C, C), jnp.float32),
        ))

    # rotary tables (same as Rotary(head_dim), base=10000), expanded to full head width
    inv_freq = 1.0 / (10000.0 ** (jnp.arange(0, hd, 2, dtype=jnp.float32) / hd))
    t = jnp.arange(T, dtype=jnp.float32)
    freqs = jnp.outer(t, inv_freq)                     # (T, hd2)
    cos, sin = jnp.cos(freqs), jnp.sin(freqs)
    cos_t = jnp.concatenate([cos, cos], axis=-1)       # (T, hd)
    sin_t = jnp.concatenate([sin, -sin], axis=-1)      # (T, hd), sign folded in

    # kernel-side parameter prep: bf16 + head-major layouts (done once, outside kernels)
    def heads_of(w):       # (C, n_head*hd) -> (n_head, C, hd)
        return jnp.transpose(w.reshape(C, n_head, hd), (1, 0, 2)).astype(jnp.bfloat16)

    layer_kparams = [dict(
        wq_h=heads_of(p["w_q"]),
        wk_h=heads_of(p["w_k"]),
        wv_h=heads_of(p["w_v"]),
        waproj_h=p["w_aproj"].reshape(n_head, hd, C).astype(jnp.bfloat16),
        w_fc=p["w_fc"].astype(jnp.bfloat16),
        w_mproj=p["w_mproj"].astype(jnp.bfloat16),
    ) for p in layer_params]
    w_lm_bf16 = wte.T.astype(jnp.bfloat16)             # tied lm_head weight

    logits = gpt_forward(idx, wte, layer_kparams, cos_t, sin_t, w_lm_bf16,
                         attn_scale=attn_scale, tq=TQ, tk=TK, th=TH, tv=TV)
    logits = jax.block_until_ready(logits)

    ref = _gpt_ref(idx, wte, layer_params, cos, sin, n_head, attn_scale)
    err = float(jnp.max(jnp.abs(logits[:, 0, :] - ref)))
    assert err < 3e-2, f"mismatch vs reference: max abs err {err}"

    print("KERNEL_OK")
</pallas_src>

<mosaic_0001>
module attributes {stable_mosaic.version = 11 : i64} {
  func.func @_qkv_rotary_kernel(%arg0: i32, %arg1: i32, %arg2: i32, %arg3: memref<1x64x256xf32, #tpu.memory_space<vmem>>, %arg4: memref<64x128xf32, #tpu.memory_space<vmem>>, %arg5: memref<64x128xf32, #tpu.memory_space<vmem>>, %arg6: memref<1x256x128xbf16, #tpu.memory_space<vmem>>, %arg7: memref<1x256x128xbf16, #tpu.memory_space<vmem>>, %arg8: memref<1x256x128xbf16, #tpu.memory_space<vmem>>, %arg9: memref<1x1x64x128xbf16, #tpu.memory_space<vmem>>, %arg10: memref<1x1x64x128xbf16, #tpu.memory_space<vmem>>, %arg11: memref<1x1x64x128xbf16, #tpu.memory_space<vmem>>) attributes {dimension_semantics = [#tpu.dimension_semantics<parallel>, #tpu.dimension_semantics<parallel>, #tpu.dimension_semantics<parallel>], iteration_bounds = array<i64: 2, 2, 2>, scalar_prefetch = 0 : i64, scratch_operands = 0 : i64, tpu.core_type = #tpu.core_type<tc>, window_params = [{transform_indices = @transform_0, window_bounds = array<i64: 1, 64, 256>}, {transform_indices = @transform_1, window_bounds = array<i64: 64, 128>}, {transform_indices = @transform_2, window_bounds = array<i64: 64, 128>}, {transform_indices = @transform_3, window_bounds = array<i64: 1, 256, 128>}, {transform_indices = @transform_4, window_bounds = array<i64: 1, 256, 128>}, {transform_indices = @transform_5, window_bounds = array<i64: 1, 256, 128>}, {transform_indices = @transform_6, window_bounds = array<i64: 1, 1, 64, 128>}, {transform_indices = @transform_7, window_bounds = array<i64: 1, 1, 64, 128>}, {transform_indices = @transform_8, window_bounds = array<i64: 1, 1, 64, 128>}]} {
    %c0 = arith.constant 0 : index
    %c0_0 = arith.constant 0 : index
    %c0_1 = arith.constant 0 : index
    %0 = vector.load %arg3[%c0, %c0_0, %c0_1] : memref<1x64x256xf32, #tpu.memory_space<vmem>>, vector<1x64x256xf32>
    %1 = vector.shape_cast %0 : vector<1x64x256xf32> to vector<64x256xf32>
    %2 = arith.mulf %1, %1 : vector<64x256xf32>
    %cst = arith.constant dense<0.000000e+00> : vector<64xf32>
    %3 = vector.multi_reduction <add>, %2, %cst [1] : vector<64x256xf32> to vector<64xf32>
    %4 = vector.shape_cast %3 : vector<64xf32> to vector<64x1xf32>
    %cst_2 = arith.constant 2.560000e+02 : f32
    %5 = vector.broadcast %cst_2 : f32 to vector<64x1xf32>
    %6 = arith.divf %4, %5 : vector<64x1xf32>
    %cst_3 = arith.constant 9.99999997E-7 : f32
    %7 = vector.broadcast %cst_3 : f32 to vector<64x1xf32>
    %8 = arith.addf %6, %7 : vector<64x1xf32>
    %9 = math.rsqrt %8 : vector<64x1xf32>
    %10 = vector.broadcast %9 : vector<64x1xf32> to vector<64x256xf32>
    %11 = arith.mulf %1, %10 : vector<64x256xf32>
    %12 = arith.truncf %11 : vector<64x256xf32> to vector<64x256xbf16>
    %c0_4 = arith.constant 0 : index
    %c0_5 = arith.constant 0 : index
    %13 = vector.load %arg4[%c0_4, %c0_5] : memref<64x128xf32, #tpu.memory_space<vmem>>, vector<64x128xf32>
    %c0_6 = arith.constant 0 : index
    %c0_7 = arith.constant 0 : index
    %14 = vector.load %arg5[%c0_6, %c0_7] : memref<64x128xf32, #tpu.memory_space<vmem>>, vector<64x128xf32>
    %c0_8 = arith.constant 0 : index
    %c0_9 = arith.constant 0 : index
    %c0_10 = arith.constant 0 : index
    %15 = vector.load %arg6[%c0_8, %c0_9, %c0_10] : memref<1x256x128xbf16, #tpu.memory_space<vmem>>, vector<1x256x128xbf16>
    %16 = vector.shape_cast %15 : vector<1x256x128xbf16> to vector<256x128xbf16>
    %cst_11 = arith.constant dense<0.000000e+00> : vector<64x128xf32>
    %17 = tpu.matmul %12, %16, %cst_11 {dimension_numbers = #tpu.dot_dimension_numbers<[1], [0], [0], [1], [0, 0, 1, 1], [], []>} : vector<64x256xbf16>, vector<256x128xbf16>, vector<64x128xf32> -> vector<64x128xf32>
    %c0_12 = arith.constant 0 : index
    %c0_13 = arith.constant 0 : index
    %c0_14 = arith.constant 0 : index
    %18 = vector.load %arg7[%c0_12, %c0_13, %c0_14] : memref<1x256x128xbf16, #tpu.memory_space<vmem>>, vector<1x256x128xbf16>
    %19 = vector.shape_cast %18 : vector<1x256x128xbf16> to vector<256x128xbf16>
    %cst_15 = arith.constant dense<0.000000e+00> : vector<64x128xf32>
    %20 = tpu.matmul %12, %19, %cst_15 {dimension_numbers = #tpu.dot_dimension_numbers<[1], [0], [0], [1], [0, 0, 1, 1], [], []>} : vector<64x256xbf16>, vector<256x128xbf16>, vector<64x128xf32> -> vector<64x128xf32>
    %c0_16 = arith.constant 0 : index
    %c0_17 = arith.constant 0 : index
    %c0_18 = arith.constant 0 : index
    %21 = vector.load %arg8[%c0_16, %c0_17, %c0_18] : memref<1x256x128xbf16, #tpu.memory_space<vmem>>, vector<1x256x128xbf16>
    %22 = vector.shape_cast %21 : vector<1x256x128xbf16> to vector<256x128xbf16>
    %cst_19 = arith.constant dense<0.000000e+00> : vector<64x128xf32>
    %23 = tpu.matmul %12, %22, %cst_19 {dimension_numbers = #tpu.dot_dimension_numbers<[1], [0], [0], [1], [0, 0, 1, 1], [], []>} : vector<64x256xbf16>, vector<256x128xbf16>, vector<64x128xf32> -> vector<64x128xf32>
    %24 = arith.mulf %17, %13 : vector<64x128xf32>
    %c64_i32 = arith.constant 64 : i32
    %25 = tpu.dynamic_rotate %17 by %c64_i32 dim 1 : vector<64x128xf32>, i32 -> vector<64x128xf32>
    %26 = arith.mulf %25, %14 : vector<64x128xf32>
    %27 = arith.addf %24, %26 : vector<64x128xf32>
    %28 = arith.mulf %20, %13 : vector<64x128xf32>
    %c64_i32_20 = arith.constant 64 : i32
    %29 = tpu.dynamic_rotate %20 by %c64_i32_20 dim 1 : vector<64x128xf32>, i32 -> vector<64x128xf32>
    %30 = arith.mulf %29, %14 : vector<64x128xf32>
    %31 = arith.addf %28, %30 : vector<64x128xf32>
    %32 = arith.truncf %27 : vector<64x128xf32> to vector<64x128xbf16>
    %c0_21 = arith.constant 0 : index
    %c0_22 = arith.constant 0 : index
    %c0_23 = arith.constant 0 : index
    %c0_24 = arith.constant 0 : index
    %33 = vector.load %arg9[%c0_21, %c0_22, %c0_23, %c0_24] : memref<1x1x64x128xbf16, #tpu.memory_space<vmem>>, vector<1x1x64x128xbf16>
    %34 = vector.shape_cast %33 : vector<1x1x64x128xbf16> to vector<64x128xbf16>
    %35 = vector.shape_cast %32 : vector<64x128xbf16> to vector<1x1x64x128xbf16>
    tpu.vector_store %arg9[%c0_21, %c0_22, %c0_23, %c0_24], %35 {strides = array<i32>} : memref<1x1x64x128xbf16, #tpu.memory_space<vmem>>, vector<1x1x64x128xbf16>,
    %36 = arith.truncf %31 : vector<64x128xf32> to vector<64x128xbf16>
    %c0_25 = arith.constant 0 : index
    %c0_26 = arith.constant 0 : index
    %c0_27 = arith.constant 0 : index
    %c0_28 = arith.constant 0 : index
    %37 = vector.load %arg10[%c0_25, %c0_26, %c0_27, %c0_28] : memref<1x1x64x128xbf16, #tpu.memory_space<vmem>>, vector<1x1x64x128xbf16>
    %38 = vector.shape_cast %37 : vector<1x1x64x128xbf16> to vector<64x128xbf16>
    %39 = vector.shape_cast %36 : vector<64x128xbf16> to vector<1x1x64x128xbf16>
    tpu.vector_store %arg10[%c0_25, %c0_26, %c0_27, %c0_28], %39 {strides = array<i32>} : memref<1x1x64x128xbf16, #tpu.memory_space<vmem>>, vector<1x1x64x128xbf16>,
    %40 = arith.truncf %23 : vector<64x128xf32> to vector<64x128xbf16>
    %c0_29 = arith.constant 0 : index
    %c0_30 = arith.constant 0 : index
    %c0_31 = arith.constant 0 : index
    %c0_32 = arith.constant 0 : index
    %41 = vector.load %arg11[%c0_29, %c0_30, %c0_31, %c0_32] : memref<1x1x64x128xbf16, #tpu.memory_space<vmem>>, vector<1x1x64x128xbf16>
    %42 = vector.shape_cast %41 : vector<1x1x64x128xbf16> to vector<64x128xbf16>
    %43 = vector.shape_cast %40 : vector<64x128xbf16> to vector<1x1x64x128xbf16>
    tpu.vector_store %arg11[%c0_29, %c0_30, %c0_31, %c0_32], %43 {strides = array<i32>} : memref<1x1x64x128xbf16, #tpu.memory_space<vmem>>, vector<1x1x64x128xbf16>,
    return
  }
  func.func @transform_0(%arg0: i32, %arg1: i32, %arg2: i32) -> (i32, i32, i32) {
    %c0_i32 = arith.constant 0 : i32
    %c0_i32_0 = arith.constant 0 : i32
    return %arg0, %arg1, %c0_i32 : i32, i32, i32
  }
  func.func @transform_1(%arg0: i32, %arg1: i32, %arg2: i32) -> (i32, i32) {
    %c0_i32 = arith.constant 0 : i32
    %c0_i32_0 = arith.constant 0 : i32
    return %arg1, %c0_i32 : i32, i32
  }
  func.func @transform_2(%arg0: i32, %arg1: i32, %arg2: i32) -> (i32, i32) {
    %c0_i32 = arith.constant 0 : i32
    %c0_i32_0 = arith.constant 0 : i32
    return %arg1, %c0_i32 : i32, i32
  }
  func.func @transform_3(%arg0: i32, %arg1: i32, %arg2: i32) -> (i32, i32, i32) {
    %c0_i32 = arith.constant 0 : i32
    %c0_i32_0 = arith.constant 0 : i32
    %c0_i32_1 = arith.constant 0 : i32
    return %arg2, %c0_i32, %c0_i32_0 : i32, i32, i32
  }
  func.func @transform_4(%arg0: i32, %arg1: i32, %arg2: i32) -> (i32, i32, i32) {
    %c0_i32 = arith.constant 0 : i32
    %c0_i32_0 = arith.constant 0 : i32
    %c0_i32_1 = arith.constant 0 : i32
    return %arg2, %c0_i32, %c0_i32_0 : i32, i32, i32
  }
  func.func @transform_5(%arg0: i32, %arg1: i32, %arg2: i32) -> (i32, i32, i32) {
    %c0_i32 = arith.constant 0 : i32
    %c0_i32_0 = arith.constant 0 : i32
    %c0_i32_1 = arith.constant 0 : i32
    return %arg2, %c0_i32, %c0_i32_0 : i32, i32, i32
  }
  func.func @transform_6(%arg0: i32, %arg1: i32, %arg2: i32) -> (i32, i32, i32, i32) {
    %c0_i32 = arith.constant 0 : i32
    %c0_i32_0 = arith.constant 0 : i32
    return %arg0, %arg2, %arg1, %c0_i32 : i32, i32, i32, i32
  }
  func.func @transform_7(%arg0: i32, %arg1: i32, %arg2: i32) -> (i32, i32, i32, i32) {
    %c0_i32 = arith.constant 0 : i32
    %c0_i32_0 = arith.constant 0 : i32
    return %arg0, %arg2, %arg1, %c0_i32 : i32, i32, i32, i32
  }
  func.func @transform_8(%arg0: i32, %arg1: i32, %arg2: i32) -> (i32, i32, i32, i32) {
    %c0_i32 = arith.constant 0 : i32
    %c0_i32_0 = arith.constant 0 : i32
    return %arg0, %arg2, %arg1, %c0_i32 : i32, i32, i32, i32
  }
}

</mosaic_0001>

<llo_original>
// kernel: tpu_custom_call.1
$region0: #{tpu_custom_call.1}
  #allocation0 [shape = 'u32[]', space=smem, size = 0x4, offset = 0x4, fixed_abs, tag = 'smem constant byte address 0x4 - core index']
  #allocation1 [shape = 'u32[144,128]{1,0:T(1,128)}', space=vmem, size = 0x12000, scoped, tag = 'internal scratch']
  %s0 = inlined_call_operand.hbm [shape: f32[2,128,256], index: 0, kind: input, shape index: {}]
  %s1 = inlined_call_operand.hbm [shape: f32[128,128], index: 1, kind: input, shape index: {}]
  %s2 = inlined_call_operand.hbm [shape: f32[128,128], index: 2, kind: input, shape index: {}]
  %s3 = inlined_call_operand.hbm [shape: bf16[2,256,128], index: 3, kind: input, shape index: {}]
  %s4 = inlined_call_operand.hbm [shape: bf16[2,256,128], index: 4, kind: input, shape index: {}]
  %s5 = inlined_call_operand.hbm [shape: bf16[2,256,128], index: 5, kind: input, shape index: {}]
  %s6 = inlined_call_operand.hbm [shape: bf16[2,2,128,128], index: 6, kind: output, shape index: {0}]
  %s7 = inlined_call_operand.hbm [shape: bf16[2,2,128,128], index: 7, kind: output, shape index: {1}]
  %s8 = inlined_call_operand.hbm [shape: bf16[2,2,128,128], index: 8, kind: output, shape index: {2}]
  %9 = xla_tuple %s6, %s7, %s8
  %s10 = sld [smem:[#allocation0]]
  $region97: #{tpu_custom_call.1} parent=0
    _
  %s12 = ssub.s32 1, %s10
  %s13 = scalar_select 0, %s12, %s10
  $region1: #{tpu_custom_call.1} parent=0
    #allocation2 [shape = 'u8[131072]{0}', space=vmem, size = 0x20000, scoped, tag = 'input window, operand 0']
    #allocation3 [shape = 's32[2]{0}', space=sflag, size = 0x8, scoped, tag = 'scoped memory for tpu_custom_call.1']
    #allocation4 [shape = 's32[2]{0}', space=sflag, size = 0x8, scoped, tag = 'scoped memory for tpu_custom_call.1']
    #allocation5 [shape = 'u8[65536]{0}', space=vmem, size = 0x10000, scoped, tag = 'input window, operand 1']
    #allocation6 [shape = 's32[2]{0}', space=sflag, size = 0x8, scoped, tag = 'scoped memory for tpu_custom_call.1']
    #allocation7 [shape = 'u8[65536]{0}', space=vmem, size = 0x10000, scoped, tag = 'input window, operand 2']
    #allocation8 [shape = 'u8[131072]{0}', space=vmem, size = 0x20000, scoped, tag = 'input window, operand 3']
    #allocation9 [shape = 's32[2]{0}', space=sflag, size = 0x8, scoped, tag = 'scoped memory for tpu_custom_call.1']
    #allocation10 [shape = 'u8[131072]{0}', space=vmem, size = 0x20000, scoped, tag = 'input window, operand 4']
    #allocation11 [shape = 'u8[131072]{0}', space=vmem, size = 0x20000, scoped, tag = 'input window, operand 5']
    #allocation12 [shape = 's32[2]{0}', space=sflag, size = 0x8, scoped, tag = 'scoped memory for tpu_custom_call.1']
    #allocation13 [shape = 'u8[32768]{0}', space=vmem, size = 0x8000, scoped, tag = 'output window, operand 0']
    #allocation14 [shape = 'u8[32768]{0}', space=vmem, size = 0x8000, scoped, tag = 'output window, operand 1']
    #allocation15 [shape = 's32[2]{0}', space=sflag, size = 0x8, scoped, tag = 'scoped memory for tpu_custom_call.1']
    #allocation16 [shape = 'u8[32768]{0}', space=vmem, size = 0x8000, scoped, tag = 'output window, operand 2']
    %14 = vsyncpa [#allocation3], 0
    %s15 = scalar_lea.sflag [#allocation3], 1
    %16 = vsyncpa %s15, 0
    %17 = vsyncpa [#allocation6], 0
    %s18 = scalar_lea.sflag [#allocation6], 1
    %19 = vsyncpa %s18, 0
    %20 = vsyncpa [#allocation9], 0
    %s21 = scalar_lea.sflag [#allocation9], 1
    %22 = vsyncpa %s21, 0
    %23 = vsyncpa [#allocation12], 0
    %s24 = scalar_lea.sflag [#allocation12], 1
    %25 = vsyncpa %s24, 0
    %26 = vsyncpa [#allocation4], 0
    %s27 = scalar_lea.sflag [#allocation4], 1
    %28 = vsyncpa %s27, 0
    %29 = vsyncpa [#allocation15], 0
    %s30 = scalar_lea.sflag [#allocation15], 1
    %31 = vsyncpa %s30, 0
    loop: start=0, step=1, limit=10
    $region2: #{tpu_custom_call.1} parent=1 // loop_pre_header
      _
    $region3: #{tpu_custom_call.1} parent=1 // loop_header
      %s33 = sphi 0, %s37
      %p34 = scmp.ge.s32.totalorder %s33, 10
      %s40 = sphi 0, %s59
      %s41 = sphi 0, %s55
      %s42 = sphi 0, %s51
      %s43 = sphi 0, %s40
      %s44 = sphi 0, %s41
      %s45 = sphi 0, %s42
      %s46 = sphi 0, %s43
      %s47 = sphi 0, %s44
      %s48 = sphi 0, %s45
      %s64 = sphi 0, %s66
      %s67 = sphi 0, %s64
      %s68 = sphi 0, %s67
      %s84 = sphi 0, %s68
      %s90 = sphi 0, %s92
      %s93 = sphi 0, %s90
      %s94 = sphi 0, %s93
      %s110 = sphi 0, %s94
      %s116 = sphi 0, %s118
      %s119 = sphi 0, %s116
      %s120 = sphi 0, %s119
      %s136 = sphi 0, %s120
      %s142 = sphi 0, %s144
      %s145 = sphi 0, %s142
      %s146 = sphi 0, %s145
      %s162 = sphi 0, %s146
      %s168 = sphi 0, %s170
      %s171 = sphi 0, %s168
      %s172 = sphi 0, %s171
      %s188 = sphi 0, %s172
      %s194 = sphi 0, %s196
      %s197 = sphi 0, %s194
      %s198 = sphi 0, %s197
      %s214 = sphi 0, %s198
      %s224 = sphi 0, %s226
      %s227 = sphi 0, %s224
      %s228 = sphi 0, %s227
      %s244 = sphi 0, %s228
      %s254 = sphi 0, %s256
      %s257 = sphi 0, %s254
      %s258 = sphi 0, %s257
      %s274 = sphi 0, %s258
      %s284 = sphi 0, %s286
      %s287 = sphi 0, %s284
      %s288 = sphi 0, %s287
      %s304 = sphi 0, %s288
    $region4: #{tpu_custom_call.1} parent=1 // loop_header_branch
      %36 = sbr.rel (%p34) target = $region8
    $region5: #{tpu_custom_call.1} parent=1 // loop_body
      %s38 = ssub.s32 %s33, 1
      %s39 = ssub.s32 %s33, 2
      %s49 = sadd.s32 1, %s42
      %p50 = scmp.ge.s32.totalorder %s49, 2
      %s51 = scalar_select %p50, 0, %s49
      %s52 = sadd.s32 1, %s41
      %s53 = scalar_select %p50, %s52, %s41
      %p54 = scmp.ge.s32.totalorder %s53, 2
      %s55 = scalar_select %p54, 0, %s53
      %s56 = sadd.s32 1, %s40
      %s57 = scalar_select %p54, %s56, %s40
      %p58 = scmp.ge.s32.totalorder %s57, 2
      %s59 = scalar_select %p58, 0, %s57
      %s60 = ssub.s32 %s40, %s59
      %s61 = ssub.s32 %s41, %s55
      %s62 = sor.u32 %s60, %s61
      %p63 = scmp.eq.s32.totalorder %s62, 0
      %s65 = sadd.s32 %s64, 1
      %s66 = scalar_select %p63, %s64, %s65
      %p69 = pneg %p63
      %p70 = scmp.eq.s32.totalorder %s33, 7
      %p71 = por %p69, %p70
      %p72 = scmp.ne.s32.totalorder %s64, %s67
      %p73 = scmp.eq.s32.totalorder %s33, 0
      %p74 = por %p72, %p73
      %p75 = scmp.ne.s32.totalorder %s64, %s67
      %p76 = scmp.eq.s32.totalorder %s38, 7
      %p77 = por %p75, %p76
      %p78 = scmp.ne.s32.totalorder %s67, %s68
      %p79 = scmp.eq.s32.totalorder %s38, 0
      %p80 = por %p78, %p79
      %p81 = scmp.ne.s32.totalorder %s67, %s68
      %p82 = scmp.eq.s32.totalorder %s39, 7
      %p83 = por %p81, %p82
      %p85 = scmp.ne.s32.totalorder %s68, %s84
      %p86 = scmp.eq.s32.totalorder %s39, 0
      %p87 = por %p85, %p86
      %s88 = ssub.s32 %s41, %s55
      %p89 = scmp.eq.s32.totalorder %s88, 0
      %s91 = sadd.s32 %s90, 1
      %s92 = scalar_select %p89, %s90, %s91
      %p95 = pneg %p89
      %p96 = scmp.eq.s32.totalorder %s33, 7
      %p97 = por %p95, %p96
      %p98 = scmp.ne.s32.totalorder %s90, %s93
      %p99 = scmp.eq.s32.totalorder %s33, 0
      %p100 = por %p98, %p99
      %p101 = scmp.ne.s32.totalorder %s90, %s93
      %p102 = scmp.eq.s32.totalorder %s38, 7
      %p103 = por %p101, %p102
      %p104 = scmp.ne.s32.totalorder %s93, %s94
      %p105 = scmp.eq.s32.totalorder %s38, 0
      %p106 = por %p104, %p105
      %p107 = scmp.ne.s32.totalorder %s93, %s94
      %p108 = scmp.eq.s32.totalorder %s39, 7
      %p109 = por %p107, %p108
      %p111 = scmp.ne.s32.totalorder %s94, %s110
      %p112 = scmp.eq.s32.totalorder %s39, 0
      %p113 = por %p111, %p112
      %s114 = ssub.s32 %s41, %s55
      %p115 = scmp.eq.s32.totalorder %s114, 0
      %s117 = sadd.s32 %s116, 1
      %s118 = scalar_select %p115, %s116, %s117
      %p121 = pneg %p115
      %p122 = scmp.eq.s32.totalorder %s33, 7
      %p123 = por %p121, %p122
      %p124 = scmp.ne.s32.totalorder %s116, %s119
      %p125 = scmp.eq.s32.totalorder %s33, 0
      %p126 = por %p124, %p125
      %p127 = scmp.ne.s32.totalorder %s116, %s119
      %p128 = scmp.eq.s32.totalorder %s38, 7
      %p129 = por %p127, %p128
      %p130 = scmp.ne.s32.totalorder %s119, %s120
      %p131 = scmp.eq.s32.totalorder %s38, 0
      %p132 = por %p130, %p131
      %p133 = scmp.ne.s32.totalorder %s119, %s120
      %p134 = scmp.eq.s32.totalorder %s39, 7
      %p135 = por %p133, %p134
      %p137 = scmp.ne.s32.totalorder %s120, %s136
      %p138 = scmp.eq.s32.totalorder %s39, 0
      %p139 = por %p137, %p138
      %s140 = ssub.s32 %s42, %s51
      %p141 = scmp.eq.s32.totalorder %s140, 0
      %s143 = sadd.s32 %s142, 1
      %s144 = scalar_select %p141, %s142, %s143
      %p147 = pneg %p141
      %p148 = scmp.eq.s32.totalorder %s33, 7
      %p149 = por %p147, %p148
      %p150 = scmp.ne.s32.totalorder %s142, %s145
      %p151 = scmp.eq.s32.totalorder %s33, 0
      %p152 = por %p150, %p151
      %p153 = scmp.ne.s32.totalorder %s142, %s145
      %p154 = scmp.eq.s32.totalorder %s38, 7
      %p155 = por %p153, %p154
      %p156 = scmp.ne.s32.totalorder %s145, %s146
      %p157 = scmp.eq.s32.totalorder %s38, 0
      %p158 = por %p156, %p157
      %p159 = scmp.ne.s32.totalorder %s145, %s146
      %p160 = scmp.eq.s32.totalorder %s39, 7
      %p161 = por %p159, %p160
      %p163 = scmp.ne.s32.totalorder %s146, %s162
      %p164 = scmp.eq.s32.totalorder %s39, 0
      %p165 = por %p163, %p164
      %s166 = ssub.s32 %s42, %s51
      %p167 = scmp.eq.s32.totalorder %s166, 0
      %s169 = sadd.s32 %s168, 1
      %s170 = scalar_select %p167, %s168, %s169
      %p173 = pneg %p167
      %p174 = scmp.eq.s32.totalorder %s33, 7
      %p175 = por %p173, %p174
      %p176 = scmp.ne.s32.totalorder %s168, %s171
      %p177 = scmp.eq.s32.totalorder %s33, 0
      %p178 = por %p176, %p177
      %p179 = scmp.ne.s32.totalorder %s168, %s171
      %p180 = scmp.eq.s32.totalorder %s38, 7
      %p181 = por %p179, %p180
      %p182 = scmp.ne.s32.totalorder %s171, %s172
      %p183 = scmp.eq.s32.totalorder %s38, 0
      %p184 = por %p182, %p183
      %p185 = scmp.ne.s32.totalorder %s171, %s172
      %p186 = scmp.eq.s32.totalorder %s39, 7
      %p187 = por %p185, %p186
      %p189 = scmp.ne.s32.totalorder %s172, %s188
      %p190 = scmp.eq.s32.totalorder %s39, 0
      %p191 = por %p189, %p190
      %s192 = ssub.s32 %s42, %s51
      %p193 = scmp.eq.s32.totalorder %s192, 0
      %s195 = sadd.s32 %s194, 1
      %s196 = scalar_select %p193, %s194, %s195
      %p199 = pneg %p193
      %p200 = scmp.eq.s32.totalorder %s33, 7
      %p201 = por %p199, %p200
      %p202 = scmp.ne.s32.totalorder %s194, %s197
      %p203 = scmp.eq.s32.totalorder %s33, 0
      %p204 = por %p202, %p203
      %p205 = scmp.ne.s32.totalorder %s194, %s197
      %p206 = scmp.eq.s32.totalorder %s38, 7
      %p207 = por %p205, %p206
      %p208 = scmp.ne.s32.totalorder %s197, %s198
      %p209 = scmp.eq.s32.totalorder %s38, 0
      %p210 = por %p208, %p209
      %p211 = scmp.ne.s32.totalorder %s197, %s198
      %p212 = scmp.eq.s32.totalorder %s39, 7
      %p213 = por %p211, %p212
      %p215 = scmp.ne.s32.totalorder %s198, %s214
      %p216 = scmp.eq.s32.totalorder %s39, 0
      %p217 = por %p215, %p216
      %s218 = ssub.s32 %s40, %s59
      %s219 = ssub.s32 %s42, %s51
      %s220 = sor.u32 %s218, %s219
      %s221 = ssub.s32 %s41, %s55
      %s222 = sor.u32 %s220, %s221
      %p223 = scmp.eq.s32.totalorder %s222, 0
      %s225 = sadd.s32 %s224, 1
      %s226 = scalar_select %p223, %s224, %s225
      %p229 = pneg %p223
      %p230 = scmp.eq.s32.totalorder %s33, 7
      %p231 = por %p229, %p230
      %p232 = scmp.ne.s32.totalorder %s224, %s227
      %p233 = scmp.eq.s32.totalorder %s33, 0
      %p234 = por %p232, %p233
      %p235 = scmp.ne.s32.totalorder %s224, %s227
      %p236 = scmp.eq.s32.totalorder %s38, 7
      %p237 = por %p235, %p236
      %p238 = scmp.ne.s32.totalorder %s227, %s228
      %p239 = scmp.eq.s32.totalorder %s38, 0
      %p240 = por %p238, %p239
      %p241 = scmp.ne.s32.totalorder %s227, %s228
      %p242 = scmp.eq.s32.totalorder %s39, 7
      %p243 = por %p241, %p242
      %p245 = scmp.ne.s32.totalorder %s228, %s244
      %p246 = scmp.eq.s32.totalorder %s39, 0
      %p247 = por %p245, %p246
      %s248 = ssub.s32 %s40, %s59
      %s249 = ssub.s32 %s42, %s51
      %s250 = sor.u32 %s248, %s249
      %s251 = ssub.s32 %s41, %s55
      %s252 = sor.u32 %s250, %s251
      %p253 = scmp.eq.s32.totalorder %s252, 0
      %s255 = sadd.s32 %s254, 1
      %s256 = scalar_select %p253, %s254, %s255
      %p259 = pneg %p253
      %p260 = scmp.eq.s32.totalorder %s33, 7
      %p261 = por %p259, %p260
      %p262 = scmp.ne.s32.totalorder %s254, %s257
      %p263 = scmp.eq.s32.totalorder %s33, 0
      %p264 = por %p262, %p263
      %p265 = scmp.ne.s32.totalorder %s254, %s257
      %p266 = scmp.eq.s32.totalorder %s38, 7
      %p267 = por %p265, %p266
      %p268 = scmp.ne.s32.totalorder %s257, %s258
      %p269 = scmp.eq.s32.totalorder %s38, 0
      %p270 = por %p268, %p269
      %p271 = scmp.ne.s32.totalorder %s257, %s258
      %p272 = scmp.eq.s32.totalorder %s39, 7
      %p273 = por %p271, %p272
      %p275 = scmp.ne.s32.totalorder %s258, %s274
      %p276 = scmp.eq.s32.totalorder %s39, 0
      %p277 = por %p275, %p276
      %s278 = ssub.s32 %s40, %s59
      %s279 = ssub.s32 %s42, %s51
      %s280 = sor.u32 %s278, %s279
      %s281 = ssub.s32 %s41, %s55
      %s282 = sor.u32 %s280, %s281
      %p283 = scmp.eq.s32.totalorder %s282, 0
      %s285 = sadd.s32 %s284, 1
      %s286 = scalar_select %p283, %s284, %s285
      %p289 = pneg %p283
      %p290 = scmp.eq.s32.totalorder %s33, 7
      %p291 = por %p289, %p290
      %p292 = scmp.ne.s32.totalorder %s284, %s287
      %p293 = scmp.eq.s32.totalorder %s33, 0
      %p294 = por %p292, %p293
      %p295 = scmp.ne.s32.totalorder %s284, %s287
      %p296 = scmp.eq.s32.totalorder %s38, 7
      %p297 = por %p295, %p296
      %p298 = scmp.ne.s32.totalorder %s287, %s288
      %p299 = scmp.eq.s32.totalorder %s38, 0
      %p300 = por %p298, %p299
      %p301 = scmp.ne.s32.totalorder %s287, %s288
      %p302 = scmp.eq.s32.totalorder %s39, 7
      %p303 = por %p301, %p302
      %p305 = scmp.ne.s32.totalorder %s288, %s304
      %p306 = scmp.eq.s32.totalorder %s39, 0
      %p307 = por %p305, %p306
      %p308 = scmp.le.s32.totalorder 1, %s33
      %p309 = scmp.lt.s32.totalorder %s33, 9
      %p310 = pnand %p308, %p309
      %p311 = pneg %p310
      // Predicated region
      $region9: #{tpu_custom_call.1} parent=5 // pred_check
        _
      $region10: #{tpu_custom_call.1} parent=5 // pred_check_branch
        %313 = sbr.rel (%p310) target = $region12
      $region11: #{tpu_custom_call.1} parent=5 // pred_region
        %s314 = ssub.s32 %s33, 1
      $region12: #{tpu_custom_call.1} parent=5 // pred_fallthru
        _
      %p315 = scmp.lt.s32.totalorder %s33, 8
      // Predicated region
      $region13: #{tpu_custom_call.1} parent=5 // pred_check
        %p316 = pneg %p315
      $region14: #{tpu_custom_call.1} parent=5 // pred_check_branch
        %318 = sbr.rel (%p316) target = $region16
      $region15: #{tpu_custom_call.1} parent=5 // pred_region
        // Predicated region
        $region17: #{tpu_custom_call.1} parent=15 // pred_check
          %p319 = pneg %p74
        $region18: #{tpu_custom_call.1} parent=15 // pred_check_branch
          %321 = sbr.rel (%p319) target = $region20
        $region19: #{tpu_custom_call.1} parent=15 // pred_region
          %s322 = sand.u32 %s64, 1
          %s323 = scalar_lea.sflag [#allocation3], %s322
          %s324 = sand.u32 %s64, 1
          %s325 = smul.addr %s324, 128
          %s326 = scalar_lea.vmem [#allocation2], %s325
          %s327 = smul.u32 8, %s41
          %s329 = ssub.s32 2048, 2048
          %330 = vsyncadd %s323, %s329
          %s331 = smul.addr %s327, 2
          %s332 = smul.addr %s40, 32
          %s333 = sadd.s32 %s331, %s332
          %s334 = smul.addr %s333, 128
          %s335 = scalar_lea.hbm %s0, %s334
          %s336 = sshll.u32 %s326, 4
          %s337 = int_to_ptr.vmem [resolvable:$true] %s336
          %342 = dma.hbm_to_vmem [thread:$0]  %s335, 2048, %s337, %s323, 256, 256, 16
        $region20: #{tpu_custom_call.1} parent=15 // pred_fallthru
          _
        // Predicated region
        $region21: #{tpu_custom_call.1} parent=15 // pred_check
          %p343 = pneg %p100
        $region22: #{tpu_custom_call.1} parent=15 // pred_check_branch
          %345 = sbr.rel (%p343) target = $region24
        $region23: #{tpu_custom_call.1} parent=15 // pred_region
          %s346 = sand.u32 %s33, 1
          %s347 = scalar_lea.sflag [#allocation6], %s346
          %s348 = sand.u32 %s90, 1
          %s349 = smul.addr %s348, 64
          %s350 = scalar_lea.vmem [#allocation5], %s349
          %s351 = smul.u32 8, %s41
          %s353 = ssub.s32 1024, 1024
          %354 = vsyncadd %s347, %s353
          %s355 = smul.addr %s351, 128
          %s356 = scalar_lea.hbm %s1, %s355
          %s357 = sshll.u32 %s350, 4
          %s358 = int_to_ptr.vmem [resolvable:$true] %s357
          %363 = dma.hbm_to_vmem [thread:$0]  %s356, 1024, %s358, %s347, 128, 128, 8
        $region24: #{tpu_custom_call.1} parent=15 // pred_fallthru
          _
        // Predicated region
        $region25: #{tpu_custom_call.1} parent=15 // pred_check
          %p364 = pneg %p126
        $region26: #{tpu_custom_call.1} parent=15 // pred_check_branch
          %366 = sbr.rel (%p364) target = $region28
        $region27: #{tpu_custom_call.1} parent=15 // pred_region
          %s367 = sand.u32 %s33, 1
          %s368 = scalar_lea.sflag [#allocation6], %s367
          %s369 = sand.u32 %s116, 1
          %s370 = smul.addr %s369, 64
          %s371 = scalar_lea.vmem [#allocation7], %s370
          %s372 = smul.u32 8, %s41
          %s374 = ssub.s32 1024, 1024
          %375 = vsyncadd %s368, %s374
          %s376 = smul.addr %s372, 128
          %s377 = scalar_lea.hbm %s2, %s376
          %s378 = sshll.u32 %s371, 4
          %s379 = int_to_ptr.vmem [resolvable:$true] %s378
          %384 = dma.hbm_to_vmem [thread:$0]  %s377, 1024, %s379, %s368, 128, 128, 8
        $region28: #{tpu_custom_call.1} parent=15 // pred_fallthru
          _
        // Predicated region
        $region29: #{tpu_custom_call.1} parent=15 // pred_check
          %p385 = pneg %p152
        $region30: #{tpu_custom_call.1} parent=15 // pred_check_branch
          %387 = sbr.rel (%p385) target = $region32
        $region31: #{tpu_custom_call.1} parent=15 // pred_region
          %s388 = sand.u32 %s33, 1
          %s389 = scalar_lea.sflag [#allocation9], %s388
          %s390 = sand.u32 %s142, 1
          %s391 = smul.addr %s390, 128
          %s392 = scalar_lea.vmem [#allocation8], %s391
          %s394 = ssub.s32 2048, 2048
          %395 = vsyncadd %s389, %s394
          %s396 = smul.addr %s42, 32
          %s397 = smul.addr %s396, 64
          %s398 = scalar_lea.hbm %s3, %s397
          %s399 = sshll.u32 %s392, 4
          %s400 = int_to_ptr.vmem [resolvable:$true] %s399
          %405 = dma.hbm_to_vmem [thread:$0]  %s398, 2048, %s400, %s389, 64, 64, 4
        $region32: #{tpu_custom_call.1} parent=15 // pred_fallthru
          _
        // Predicated region
        $region33: #{tpu_custom_call.1} parent=15 // pred_check
          %p406 = pneg %p178
        $region34: #{tpu_custom_call.1} parent=15 // pred_check_branch
          %408 = sbr.rel (%p406) target = $region36
        $region35: #{tpu_custom_call.1} parent=15 // pred_region
          %s409 = sand.u32 %s33, 1
          %s410 = scalar_lea.sflag [#allocation9], %s409
          %s411 = sand.u32 %s168, 1
          %s412 = smul.addr %s411, 128
          %s413 = scalar_lea.vmem [#allocation10], %s412
          %s415 = ssub.s32 2048, 2048
          %416 = vsyncadd %s410, %s415
          %s417 = smul.addr %s42, 32
          %s418 = smul.addr %s417, 64
          %s419 = scalar_lea.hbm %s4, %s418
          %s420 = sshll.u32 %s413, 4
          %s421 = int_to_ptr.vmem [resolvable:$true] %s420
          %426 = dma.hbm_to_vmem [thread:$0]  %s419, 2048, %s421, %s410, 64, 64, 4
        $region36: #{tpu_custom_call.1} parent=15 // pred_fallthru
          _
        // Predicated region
        $region37: #{tpu_custom_call.1} parent=15 // pred_check
          %p427 = pneg %p204
        $region38: #{tpu_custom_call.1} parent=15 // pred_check_branch
          %429 = sbr.rel (%p427) target = $region40
        $region39: #{tpu_custom_call.1} parent=15 // pred_region
          %s430 = sand.u32 %s194, 1
          %s431 = scalar_lea.sflag [#allocation12], %s430
          %s432 = sand.u32 %s194, 1
          %s433 = smul.addr %s432, 128
          %s434 = scalar_lea.vmem [#allocation11], %s433
          %s436 = ssub.s32 2048, 2048
          %437 = vsyncadd %s431, %s436
          %s438 = smul.addr %s42, 32
          %s439 = smul.addr %s438, 64
          %s440 = scalar_lea.hbm %s5, %s439
          %s441 = sshll.u32 %s434, 4
          %s442 = int_to_ptr.vmem [resolvable:$true] %s441
          %447 = dma.hbm_to_vmem [thread:$0]  %s440, 2048, %s442, %s431, 64, 64, 4
        $region40: #{tpu_custom_call.1} parent=15 // pred_fallthru
          _
      $region16: #{tpu_custom_call.1} parent=5 // pred_fallthru
        _
      %p448 = scmp.le.s32.totalorder 1, %s33
      %p449 = scmp.lt.s32.totalorder %s33, 9
      %p450 = pnand %p448, %p449
      %p451 = pneg %p450
      // Predicated region
      $region41: #{tpu_custom_call.1} parent=5 // pred_check
        _
      $region42: #{tpu_custom_call.1} parent=5 // pred_check_branch
        %453 = sbr.rel (%p450) target = $region44
      $region43: #{tpu_custom_call.1} parent=5 // pred_region
        %s454 = ssub.s32 %s33, 1
        %s455 = sand.u32 %s67, 1
        %s456 = scalar_lea.sflag [#allocation3], %s455
        %s457 = sand.u32 %s67, 1
        %s458 = smul.addr %s457, 128
        %s459 = scalar_lea.vmem [#allocation2], %s458
        // Predicated region
        $region45: #{tpu_custom_call.1} parent=43 // pred_check
          %p460 = pneg %p80
        $region46: #{tpu_custom_call.1} parent=43 // pred_check_branch
          %462 = sbr.rel (%p460) target = $region48
        $region47: #{tpu_custom_call.1} parent=43 // pred_region
          %463 = dma.done %s456, 2048
        $region48: #{tpu_custom_call.1} parent=43 // pred_fallthru
          _
        %s464 = sand.u32 %s38, 1
        %s465 = scalar_lea.sflag [#allocation6], %s464
        %s466 = sand.u32 %s93, 1
        %s467 = smul.addr %s466, 64
        %s468 = scalar_lea.vmem [#allocation5], %s467
        // Predicated region
        $region49: #{tpu_custom_call.1} parent=43 // pred_check
          %p469 = pneg %p106
        $region50: #{tpu_custom_call.1} parent=43 // pred_check_branch
          %471 = sbr.rel (%p469) target = $region52
        $region51: #{tpu_custom_call.1} parent=43 // pred_region
          %472 = dma.done %s465, 1024
        $region52: #{tpu_custom_call.1} parent=43 // pred_fallthru
          _
        %s473 = sand.u32 %s38, 1
        %s474 = scalar_lea.sflag [#allocation6], %s473
        %s475 = sand.u32 %s119, 1
        %s476 = smul.addr %s475, 64
        %s477 = scalar_lea.vmem [#allocation7], %s476
        // Predicated region
        $region53: #{tpu_custom_call.1} parent=43 // pred_check
          %p478 = pneg %p132
        $region54: #{tpu_custom_call.1} parent=43 // pred_check_branch
          %480 = sbr.rel (%p478) target = $region56
        $region55: #{tpu_custom_call.1} parent=43 // pred_region
          %481 = dma.done %s474, 1024
        $region56: #{tpu_custom_call.1} parent=43 // pred_fallthru
          _
        %s482 = sand.u32 %s38, 1
        %s483 = scalar_lea.sflag [#allocation9], %s482
        %s484 = sand.u32 %s145, 1
        %s485 = smul.addr %s484, 128
        %s486 = scalar_lea.vmem [#allocation8], %s485
        // Predicated region
        $region57: #{tpu_custom_call.1} parent=43 // pred_check
          %p487 = pneg %p158
        $region58: #{tpu_custom_call.1} parent=43 // pred_check_branch
          %489 = sbr.rel (%p487) target = $region60
        $region59: #{tpu_custom_call.1} parent=43 // pred_region
          %490 = dma.done %s483, 2048
        $region60: #{tpu_custom_call.1} parent=43 // pred_fallthru
          _
        %s491 = sand.u32 %s38, 1
        %s492 = scalar_lea.sflag [#allocation9], %s491
        %s493 = sand.u32 %s171, 1
        %s494 = smul.addr %s493, 128
        %s495 = scalar_lea.vmem [#allocation10], %s494
        // Predicated region
        $region61: #{tpu_custom_call.1} parent=43 // pred_check
          %p496 = pneg %p184
        $region62: #{tpu_custom_call.1} parent=43 // pred_check_branch
          %498 = sbr.rel (%p496) target = $region64
        $region63: #{tpu_custom_call.1} parent=43 // pred_region
          %499 = dma.done %s492, 2048
        $region64: #{tpu_custom_call.1} parent=43 // pred_fallthru
          _
        %s500 = sand.u32 %s197, 1
        %s501 = scalar_lea.sflag [#allocation12], %s500
        %s502 = sand.u32 %s197, 1
        %s503 = smul.addr %s502, 128
        %s504 = scalar_lea.vmem [#allocation11], %s503
        // Predicated region
        $region65: #{tpu_custom_call.1} parent=43 // pred_check
          %p505 = pneg %p210
        $region66: #{tpu_custom_call.1} parent=43 // pred_check_branch
          %507 = sbr.rel (%p505) target = $region68
        $region67: #{tpu_custom_call.1} parent=43 // pred_region
          %508 = dma.done %s501, 2048
        $region68: #{tpu_custom_call.1} parent=43 // pred_fallthru
          _
        %s509 = sand.u32 %s67, 1
        %s510 = scalar_lea.sflag [#allocation3], %s509
        %s511 = sand.u32 %s67, 1
        %s512 = smul.addr %s511, 128
        %s513 = scalar_lea.vmem [#allocation2], %s512
        %p514 = pneg %p80
        %p515 = pneg %p77
        %s516 = sand.u32 %s38, 1
        %s517 = scalar_lea.sflag [#allocation6], %s516
        %s518 = sand.u32 %s93, 1
        %s519 = smul.addr %s518, 64
        %s520 = scalar_lea.vmem [#allocation5], %s519
        %p521 = pneg %p106
        %p522 = pneg %p103
        %s523 = sand.u32 %s38, 1
        %s524 = scalar_lea.sflag [#allocation6], %s523
        %s525 = sand.u32 %s119, 1
        %s526 = smul.addr %s525, 64
        %s527 = scalar_lea.vmem [#allocation7], %s526
        %p528 = pneg %p132
        %p529 = pneg %p129
        %s530 = sand.u32 %s38, 1
        %s531 = scalar_lea.sflag [#allocation9], %s530
        %s532 = sand.u32 %s145, 1
        %s533 = smul.addr %s532, 128
        %s534 = scalar_lea.vmem [#allocation8], %s533
        %p535 = pneg %p158
        %p536 = pneg %p155
        %s537 = sand.u32 %s38, 1
        %s538 = scalar_lea.sflag [#allocation9], %s537
        %s539 = sand.u32 %s171, 1
        %s540 = smul.addr %s539, 128
        %s541 = scalar_lea.vmem [#allocation10], %s540
        %p542 = pneg %p184
        %p543 = pneg %p181
        %s544 = sand.u32 %s197, 1
        %s545 = scalar_lea.sflag [#allocation12], %s544
        %s546 = sand.u32 %s197, 1
        %s547 = smul.addr %s546, 128
        %s548 = scalar_lea.vmem [#allocation11], %s547
        %p549 = pneg %p210
        %p550 = pneg %p207
        %p551 = pneg %p240
        %p552 = pneg %p237
        %s553 = sand.u32 %s227, 1
        %s554 = scalar_lea.sflag [#allocation4], %s553
        %s555 = sand.u32 %s227, 1
        %s556 = smul.addr %s555, 32
        %s557 = scalar_lea.vmem [#allocation13], %s556
        %p558 = pneg %p270
        %p559 = pneg %p267
        %s560 = sand.u32 %s38, 1
        %s561 = scalar_lea.sflag [#allocation15], %s560
        %s562 = sand.u32 %s257, 1
        %s563 = smul.addr %s562, 32
        %s564 = scalar_lea.vmem [#allocation14], %s563
        %p565 = pneg %p300
        %p566 = pneg %p297
        %s567 = sand.u32 %s38, 1
        %s568 = scalar_lea.sflag [#allocation15], %s567
        %s569 = sand.u32 %s287, 1
        %s570 = smul.addr %s569, 32
        %s571 = scalar_lea.vmem [#allocation16], %s570
        %s572 = smul.u32 8, %s44
        %s573 = smul.u32 8, %s44
        %s574 = smul.u32 8, %s44
        %s575 = smul.u32 8, %s44
        %s576 = smul.u32 8, %s44
        %s577 = smul.u32 8, %s44
        %v579 = vld [vmem:[%s459] sm:$0xff]
        %v580 = vld [vmem:[%s459 + $0x8] sm:$0xff]
        %v581 = vld [vmem:[%s459 + $0x10] sm:$0xff]
        %v582 = vld [vmem:[%s459 + $0x18] sm:$0xff]
        %v583 = vld [vmem:[%s459 + $0x20] sm:$0xff]
        %v584 = vld [vmem:[%s459 + $0x28] sm:$0xff]
        %v585 = vld [vmem:[%s459 + $0x30] sm:$0xff]
        %v586 = vld [vmem:[%s459 + $0x38] sm:$0xff]
        %v587 = vld [vmem:[%s459 + $0x40] sm:$0xff]
        %v588 = vld [vmem:[%s459 + $0x48] sm:$0xff]
        %v589 = vld [vmem:[%s459 + $0x50] sm:$0xff]
        %v590 = vld [vmem:[%s459 + $0x58] sm:$0xff]
        %v591 = vld [vmem:[%s459 + $0x60] sm:$0xff]
        %v592 = vld [vmem:[%s459 + $0x68] sm:$0xff]
        %v593 = vld [vmem:[%s459 + $0x70] sm:$0xff]
        %v594 = vld [vmem:[%s459 + $0x78] sm:$0xff]
        %v595 = vmul.f32 %v579, %v579
        %v596 = vmul.f32 %v580, %v580
        %v597 = vmul.f32 %v581, %v581
        %v598 = vmul.f32 %v582, %v582
        %v599 = vmul.f32 %v583, %v583
        %v600 = vmul.f32 %v584, %v584
        %v601 = vmul.f32 %v585, %v585
        %v602 = vmul.f32 %v586, %v586
        %v603 = vmul.f32 %v587, %v587
        %v604 = vmul.f32 %v588, %v588
        %v605 = vmul.f32 %v589, %v589
        %v606 = vmul.f32 %v590, %v590
        %v607 = vmul.f32 %v591, %v591
        %v608 = vmul.f32 %v592, %v592
        %v609 = vmul.f32 %v593, %v593
        %v610 = vmul.f32 %v594, %v594
        %v611 = vadd.f32 %v595, %v596
        %612 = vadd.xlane.f32.xlu0 %v611
        %v613 = vpop.xlane.xlu0 %612
        %v614 = vadd.f32 %v597, %v598
        %615 = vadd.xlane.f32.xlu0 %v614
        %v616 = vpop.xlane.xlu0 %615
        %v617 = vadd.f32 %v599, %v600
        %618 = vadd.xlane.f32.xlu0 %v617
        %v619 = vpop.xlane.xlu0 %618
        %v620 = vadd.f32 %v601, %v602
        %621 = vadd.xlane.f32.xlu0 %v620
        %v622 = vpop.xlane.xlu0 %621
        %v623 = vadd.f32 %v603, %v604
        %624 = vadd.xlane.f32.xlu0 %v623
        %v625 = vpop.xlane.xlu0 %624
        %v626 = vadd.f32 %v605, %v606
        %627 = vadd.xlane.f32.xlu0 %v626
        %v628 = vpop.xlane.xlu0 %627
        %v629 = vadd.f32 %v607, %v608
        %630 = vadd.xlane.f32.xlu0 %v629
        %v631 = vpop.xlane.xlu0 %630
        %v632 = vadd.f32 %v609, %v610
        %633 = vadd.xlane.f32.xlu0 %v632
        %v634 = vpop.xlane.xlu0 %633
        %v635 = vrcp.pop 256.0
        %v636 = vmul.f32 %v613, %v635
        %v637 = vmul.f32 %v616, %v635
        %v638 = vmul.f32 %v619, %v635
        %v639 = vmul.f32 %v622, %v635
        %v640 = vmul.f32 %v625, %v635
        %v641 = vmul.f32 %v628, %v635
        %v642 = vmul.f32 %v631, %v635
        %v643 = vmul.f32 %v634, %v635
        %v644 = vadd.f32 %v636, 1e-06
        %v645 = vadd.f32 %v637, 1e-06
        %v646 = vadd.f32 %v638, 1e-06
        %v647 = vadd.f32 %v639, 1e-06
        %v648 = vadd.f32 %v640, 1e-06
        %v649 = vadd.f32 %v641, 1e-06
        %v650 = vadd.f32 %v642, 1e-06
        %v651 = vadd.f32 %v643, 1e-06
        %v652 = vrsqrt.pop %v644
        %v653 = vrsqrt.pop %v645
        %v654 = vrsqrt.pop %v646
        %v655 = vrsqrt.pop %v647
        %v656 = vrsqrt.pop %v648
        %v657 = vrsqrt.pop %v649
        %v658 = vrsqrt.pop %v650
        %v659 = vrsqrt.pop %v651
        %v660 = vmul.f32 %v579, %v652
        %v661 = vmul.f32 %v580, %v652
        %v662 = vmul.f32 %v581, %v653
        %v663 = vmul.f32 %v582, %v653
        %v664 = vmul.f32 %v583, %v654
        %v665 = vmul.f32 %v584, %v654
        %v666 = vmul.f32 %v585, %v655
        %v667 = vmul.f32 %v586, %v655
        %v668 = vmul.f32 %v587, %v656
        %v669 = vmul.f32 %v588, %v656
        %v670 = vmul.f32 %v589, %v657
        %v671 = vmul.f32 %v590, %v657
        %v672 = vmul.f32 %v591, %v658
        %v673 = vmul.f32 %v592, %v658
        %v674 = vmul.f32 %v593, %v659
        %v675 = vmul.f32 %v594, %v659
        %v676 = vpack.c.bf16 %v662, %v660
        %v677 = vpack.c.bf16 %v663, %v661
        %v678 = vpack.c.bf16 %v666, %v664
        %v679 = vpack.c.bf16 %v667, %v665
        %v680 = vpack.c.bf16 %v670, %v668
        %v681 = vpack.c.bf16 %v671, %v669
        %v682 = vpack.c.bf16 %v674, %v672
        %v683 = vpack.c.bf16 %v675, %v673
        %v684 = vld [vmem:[%s468] sm:$0xff]
        %v685 = vld [vmem:[%s468 + $0x8] sm:$0xff]
        %v686 = vld [vmem:[%s468 + $0x10] sm:$0xff]
        %v687 = vld [vmem:[%s468 + $0x18] sm:$0xff]
        %v688 = vld [vmem:[%s468 + $0x20] sm:$0xff]
        %v689 = vld [vmem:[%s468 + $0x28] sm:$0xff]
        %v690 = vld [vmem:[%s468 + $0x30] sm:$0xff]
        %v691 = vld [vmem:[%s468 + $0x38] sm:$0xff]
        %v692 = vld [vmem:[%s477] sm:$0xff]
        %v693 = vld [vmem:[%s477 + $0x8] sm:$0xff]
        %v694 = vld [vmem:[%s477 + $0x10] sm:$0xff]
        %v695 = vld [vmem:[%s477 + $0x18] sm:$0xff]
        %v696 = vld [vmem:[%s477 + $0x20] sm:$0xff]
        %v697 = vld [vmem:[%s477 + $0x28] sm:$0xff]
        %v698 = vld [vmem:[%s477 + $0x30] sm:$0xff]
        %v699 = vld [vmem:[%s477 + $0x38] sm:$0xff]
        %v700 = vld [vmem:[%s486] sm:$0xf]
        %v701 = vld [vmem:[%s486 + $0x4] sm:$0xf]
        %v702 = vld [vmem:[%s486 + $0x8] sm:$0xf]
        %v703 = vld [vmem:[%s486 + $0xc] sm:$0xf]
        %v704 = vld [vmem:[%s486 + $0x10] sm:$0xf]
        %v705 = vld [vmem:[%s486 + $0x14] sm:$0xf]
        %v706 = vld [vmem:[%s486 + $0x18] sm:$0xf]
        %v707 = vld [vmem:[%s486 + $0x1c] sm:$0xf]
        %v708 = vld [vmem:[%s486 + $0x20] sm:$0xf]
        %v709 = vld [vmem:[%s486 + $0x24] sm:$0xf]
        %v710 = vld [vmem:[%s486 + $0x28] sm:$0xf]
        %v711 = vld [vmem:[%s486 + $0x2c] sm:$0xf]
        %v712 = vld [vmem:[%s486 + $0x30] sm:$0xf]
        %v713 = vld [vmem:[%s486 + $0x34] sm:$0xf]
        %v714 = vld [vmem:[%s486 + $0x38] sm:$0xf]
        %v715 = vld [vmem:[%s486 + $0x3c] sm:$0xf]
        %v716 = vld [vmem:[%s486 + $0x40] sm:$0xf]
        %v717 = vld [vmem:[%s486 + $0x44] sm:$0xf]
        %v718 = vld [vmem:[%s486 + $0x48] sm:$0xf]
        %v719 = vld [vmem:[%s486 + $0x4c] sm:$0xf]
        %v720 = vld [vmem:[%s486 + $0x50] sm:$0xf]
        %v721 = vld [vmem:[%s486 + $0x54] sm:$0xf]
        %v722 = vld [vmem:[%s486 + $0x58] sm:$0xf]
        %v723 = vld [vmem:[%s486 + $0x5c] sm:$0xf]
        %v724 = vld [vmem:[%s486 + $0x60] sm:$0xf]
        %v725 = vld [vmem:[%s486 + $0x64] sm:$0xf]
        %v726 = vld [vmem:[%s486 + $0x68] sm:$0xf]
        %v727 = vld [vmem:[%s486 + $0x6c] sm:$0xf]
        %v728 = vld [vmem:[%s486 + $0x70] sm:$0xf]
        %v729 = vld [vmem:[%s486 + $0x74] sm:$0xf]
        %v730 = vld [vmem:[%s486 + $0x78] sm:$0xf]
        %v731 = vld [vmem:[%s486 + $0x7c] sm:$0xf]
        %v764 = vunpack.c.l.b16 %v700
        %v765 = vunpack.c.l.b16 %v701
        %v766 = vunpack.c.l.b16 %v702
        %v767 = vunpack.c.l.b16 %v703
        %v768 = vunpack.c.l.b16 %v704
        %v769 = vunpack.c.l.b16 %v705
        %v770 = vunpack.c.l.b16 %v706
        %v771 = vunpack.c.l.b16 %v707
        %v772 = vunpack.c.l.b16 %v708
        %v773 = vunpack.c.l.b16 %v709
        %v774 = vunpack.c.l.b16 %v710
        %v775 = vunpack.c.l.b16 %v711
        %v776 = vunpack.c.l.b16 %v712
        %v777 = vunpack.c.l.b16 %v713
        %v778 = vunpack.c.l.b16 %v714
        %v779 = vunpack.c.l.b16 %v715
        %v780 = vunpack.c.l.b16 %v716
        %v781 = vunpack.c.l.b16 %v717
        %v782 = vunpack.c.l.b16 %v718
        %v783 = vunpack.c.l.b16 %v719
        %v784 = vunpack.c.l.b16 %v720
        %v785 = vunpack.c.l.b16 %v721
        %v786 = vunpack.c.l.b16 %v722
        %v787 = vunpack.c.l.b16 %v723
        %v788 = vunpack.c.l.b16 %v724
        %v789 = vunpack.c.l.b16 %v725
        %v790 = vunpack.c.l.b16 %v726
        %v791 = vunpack.c.l.b16 %v727
        %v792 = vunpack.c.l.b16 %v728
        %v793 = vunpack.c.l.b16 %v729
        %v794 = vunpack.c.l.b16 %v730
        %v795 = vunpack.c.l.b16 %v731
        %v796 = vpack.c.b16 %v765, %v764
        %v797 = vpack.c.b16 %v767, %v766
        %v798 = vpack.c.b16 %v769, %v768
        %v799 = vpack.c.b16 %v771, %v770
        %v800 = vpack.c.b16 %v773, %v772
        %v801 = vpack.c.b16 %v775, %v774
        %v802 = vpack.c.b16 %v777, %v776
        %v803 = vpack.c.b16 %v779, %v778
        %v804 = vpack.c.b16 %v781, %v780
        %v805 = vpack.c.b16 %v783, %v782
        %v806 = vpack.c.b16 %v785, %v784
        %v807 = vpack.c.b16 %v787, %v786
        %v808 = vpack.c.b16 %v789, %v788
        %v809 = vpack.c.b16 %v791, %v790
        %v810 = vpack.c.b16 %v793, %v792
        %v811 = vpack.c.b16 %v795, %v794
        %828 = vmatprep.subr.bf16.mxu0 0
        %829 = vmatpush1.bf16.msra.mxu0 %v796
        %830 = vmatprep.subr.bf16.mxu0 0
        %831 = vmatpush1.bf16.msra.mxu0 %v797
        %832 = vmatprep.subr.bf16.mxu0 0
        %833 = vmatpush1.bf16.msra.mxu0 %v798
        %834 = vmatprep.subr.bf16.mxu0 0
        %835 = vmatpush1.bf16.msra.mxu0 %v799
        %836 = vmatprep.subr.bf16.mxu0 0
        %837 = vmatpush1.bf16.msra.mxu0 %v800
        %838 = vmatprep.subr.bf16.mxu0 0
        %839 = vmatpush1.bf16.msra.mxu0 %v801
        %840 = vmatprep.subr.bf16.mxu0 0
        %841 = vmatpush1.bf16.msra.mxu0 %v802
        %842 = vmatprep.subr.bf16.mxu0 0
        %843 = vmatpush1.bf16.msra.mxu0 %v803
        %844 = vmatprep.subr.bf16.mxu0 0
        %845 = vmatpush1.bf16.msra.mxu0 %v804
        %846 = vmatprep.subr.bf16.mxu0 0
        %847 = vmatpush1.bf16.msra.mxu0 %v805
        %848 = vmatprep.subr.bf16.mxu0 0
        %849 = vmatpush1.bf16.msra.mxu0 %v806
        %850 = vmatprep.subr.bf16.mxu0 0
        %851 = vmatpush1.bf16.msra.mxu0 %v807
        %852 = vmatprep.subr.bf16.mxu0 0
        %853 = vmatpush1.bf16.msra.mxu0 %v808
        %854 = vmatprep.subr.bf16.mxu0 0
        %855 = vmatpush1.bf16.msra.mxu0 %v809
        %856 = vmatprep.subr.bf16.mxu0 0
        %857 = vmatpush1.bf16.msra.mxu0 %v810
        %858 = vmatprep.subr.bf16.mxu0 0
        %859 = vmatpush1.bf16.msra.mxu0 %v811
        %860 = vmatprep.mubr.bf16.mxu0 %v677
        %861 = vmatmul.mubr.bf16.gmra.mrb[0].mxu0 %v676
        %v862 = vpop.f32.mrb[0].mxu0
        %v863 = vadd.f32 0.0, %v862
        %v864 = vpop.f32.mrb[0].mxu0
        %v865 = vpop.f32.mrb[0].mxu0
        %v866 = vadd.f32 0.0, %v865
        %v867 = vpop.f32.mrb[0].mxu0
        %868 = vmatprep.mubr.bf16.mxu0 %v679
        %869 = vmatmul.mubr.bf16.gmra.mrb[0].mxu0 %v678
        %v870 = vpop.f32.mrb[0].mxu0
        %v871 = vadd.f32 0.0, %v870
        %v872 = vpop.f32.mrb[0].mxu0
        %v873 = vpop.f32.mrb[0].mxu0
        %v874 = vadd.f32 0.0, %v873
        %v875 = vpop.f32.mrb[0].mxu0
        %876 = vmatprep.mubr.bf16.mxu0 %v681
        %877 = vmatmul.mubr.bf16.gmra.mrb[0].mxu0 %v680
        %v878 = vpop.f32.mrb[0].mxu0
        %v879 = vadd.f32 0.0, %v878
        %v880 = vpop.f32.mrb[0].mxu0
        %v881 = vpop.f32.mrb[0].mxu0
        %v882 = vadd.f32 0.0, %v881
        %v883 = vpop.f32.mrb[0].mxu0
        %884 = vmatprep.mubr.bf16.mxu0 %v683
        %885 = vmatmul.mubr.bf16.gmra.mrb[0].mxu0 %v682
        %v886 = vpop.f32.mrb[0].mxu0
        %v887 = vadd.f32 0.0, %v886
        %v888 = vpop.f32.mrb[0].mxu0
        %v889 = vpop.f32.mrb[0].mxu0
        %v890 = vadd.f32 0.0, %v889
        %v891 = vpop.f32.mrb[0].mxu0
        %892 = vdwg.mxu0
        %v893 = vld [vmem:[%s495] sm:$0xf]
        %v894 = vld [vmem:[%s495 + $0x4] sm:$0xf]
        %v895 = vld [vmem:[%s495 + $0x8] sm:$0xf]
        %v896 = vld [vmem:[%s495 + $0xc] sm:$0xf]
        %v897 = vld [vmem:[%s495 + $0x10] sm:$0xf]
        %v898 = vld [vmem:[%s495 + $0x14] sm:$0xf]
        %v899 = vld [vmem:[%s495 + $0x18] sm:$0xf]
        %v900 = vld [vmem:[%s495 + $0x1c] sm:$0xf]
        %v901 = vld [vmem:[%s495 + $0x20] sm:$0xf]
        %v902 = vld [vmem:[%s495 + $0x24] sm:$0xf]
        %v903 = vld [vmem:[%s495 + $0x28] sm:$0xf]
        %v904 = vld [vmem:[%s495 + $0x2c] sm:$0xf]
        %v905 = vld [vmem:[%s495 + $0x30] sm:$0xf]
        %v906 = vld [vmem:[%s495 + $0x34] sm:$0xf]
        %v907 = vld [vmem:[%s495 + $0x38] sm:$0xf]
        %v908 = vld [vmem:[%s495 + $0x3c] sm:$0xf]
        %v909 = vld [vmem:[%s495 + $0x40] sm:$0xf]
        %v910 = vld [vmem:[%s495 + $0x44] sm:$0xf]
        %v911 = vld [vmem:[%s495 + $0x48] sm:$0xf]
        %v912 = vld [vmem:[%s495 + $0x4c] sm:$0xf]
        %v913 = vld [vmem:[%s495 + $0x50] sm:$0xf]
        %v914 = vld [vmem:[%s495 + $0x54] sm:$0xf]
        %v915 = vld [vmem:[%s495 + $0x58] sm:$0xf]
        %v916 = vld [vmem:[%s495 + $0x5c] sm:$0xf]
        %v917 = vld [vmem:[%s495 + $0x60] sm:$0xf]
        %v918 = vld [vmem:[%s495 + $0x64] sm:$0xf]
        %v919 = vld [vmem:[%s495 + $0x68] sm:$0xf]
        %v920 = vld [vmem:[%s495 + $0x6c] sm:$0xf]
        %v921 = vld [vmem:[%s495 + $0x70] sm:$0xf]
        %v922 = vld [vmem:[%s495 + $0x74] sm:$0xf]
        %v923 = vld [vmem:[%s495 + $0x78] sm:$0xf]
        %v924 = vld [vmem:[%s495 + $0x7c] sm:$0xf]
        %v957 = vunpack.c.l.b16 %v893
        %v958 = vunpack.c.l.b16 %v894
        %v959 = vunpack.c.l.b16 %v895
        %v960 = vunpack.c.l.b16 %v896
        %v961 = vunpack.c.l.b16 %v897
        %v962 = vunpack.c.l.b16 %v898
        %v963 = vunpack.c.l.b16 %v899
        %v964 = vunpack.c.l.b16 %v900
        %v965 = vunpack.c.l.b16 %v901
        %v966 = vunpack.c.l.b16 %v902
        %v967 = vunpack.c.l.b16 %v903
        %v968 = vunpack.c.l.b16 %v904
        %v969 = vunpack.c.l.b16 %v905
        %v970 = vunpack.c.l.b16 %v906
        %v971 = vunpack.c.l.b16 %v907
        %v972 = vunpack.c.l.b16 %v908
        %v973 = vunpack.c.l.b16 %v909
        %v974 = vunpack.c.l.b16 %v910
        %v975 = vunpack.c.l.b16 %v911
        %v976 = vunpack.c.l.b16 %v912
        %v977 = vunpack.c.l.b16 %v913
        %v978 = vunpack.c.l.b16 %v914
        %v979 = vunpack.c.l.b16 %v915
        %v980 = vunpack.c.l.b16 %v916
        %v981 = vunpack.c.l.b16 %v917
        %v982 = vunpack.c.l.b16 %v918
        %v983 = vunpack.c.l.b16 %v919
        %v984 = vunpack.c.l.b16 %v920
        %v985 = vunpack.c.l.b16 %v921
        %v986 = vunpack.c.l.b16 %v922
        %v987 = vunpack.c.l.b16 %v923
        %v988 = vunpack.c.l.b16 %v924
        %v989 = vpack.c.b16 %v958, %v957
        %v990 = vpack.c.b16 %v960, %v959
        %v991 = vpack.c.b16 %v962, %v961
        %v992 = vpack.c.b16 %v964, %v963
        %v993 = vpack.c.b16 %v966, %v965
        %v994 = vpack.c.b16 %v968, %v967
        %v995 = vpack.c.b16 %v970, %v969
        %v996 = vpack.c.b16 %v972, %v971
        %v997 = vpack.c.b16 %v974, %v973
        %v998 = vpack.c.b16 %v976, %v975
        %v999 = vpack.c.b16 %v978, %v977
        %v1000 = vpack.c.b16 %v980, %v979
        %v1001 = vpack.c.b16 %v982, %v981
        %v1002 = vpack.c.b16 %v984, %v983
        %v1003 = vpack.c.b16 %v986, %v985
        %v1004 = vpack.c.b16 %v988, %v987
        %1021 = vmatprep.subr.bf16.mxu0 0
        %1022 = vmatpush1.bf16.msra.mxu0 %v989
        %1023 = vmatprep.subr.bf16.mxu0 0
        %1024 = vmatpush1.bf16.msra.mxu0 %v990
        %1025 = vmatprep.subr.bf16.mxu0 0
        %1026 = vmatpush1.bf16.msra.mxu0 %v991
        %1027 = vmatprep.subr.bf16.mxu0 0
        %1028 = vmatpush1.bf16.msra.mxu0 %v992
        %1029 = vmatprep.subr.bf16.mxu0 0
        %1030 = vmatpush1.bf16.msra.mxu0 %v993
        %1031 = vmatprep.subr.bf16.mxu0 0
        %1032 = vmatpush1.bf16.msra.mxu0 %v994
        %1033 = vmatprep.subr.bf16.mxu0 0
        %1034 = vmatpush1.bf16.msra.mxu0 %v995
        %1035 = vmatprep.subr.bf16.mxu0 0
        %1036 = vmatpush1.bf16.msra.mxu0 %v996
        %1037 = vmatprep.subr.bf16.mxu0 0
        %1038 = vmatpush1.bf16.msra.mxu0 %v997
        %1039 = vmatprep.subr.bf16.mxu0 0
        %1040 = vmatpush1.bf16.msra.mxu0 %v998
        %1041 = vmatprep.subr.bf16.mxu0 0
        %1042 = vmatpush1.bf16.msra.mxu0 %v999
        %1043 = vmatprep.subr.bf16.mxu0 0
        %1044 = vmatpush1.bf16.msra.mxu0 %v1000
        %1045 = vmatprep.subr.bf16.mxu0 0
        %1046 = vmatpush1.bf16.msra.mxu0 %v1001
        %1047 = vmatprep.subr.bf16.mxu0 0
        %1048 = vmatpush1.bf16.msra.mxu0 %v1002
        %1049 = vmatprep.subr.bf16.mxu0 0
        %1050 = vmatpush1.bf16.msra.mxu0 %v1003
        %1051 = vmatprep.subr.bf16.mxu0 0
        %1052 = vmatpush1.bf16.msra.mxu0 %v1004
        %1053 = vmatprep.mubr.bf16.mxu0 %v677
        %1054 = vmatmul.mubr.bf16.gmra.mrb[0].mxu0 %v676
        %v1055 = vpop.f32.mrb[0].mxu0
        %v1056 = vadd.f32 0.0, %v1055
        %v1057 = vpop.f32.mrb[0].mxu0
        %v1058 = vpop.f32.mrb[0].mxu0
        %v1059 = vadd.f32 0.0, %v1058
        %v1060 = vpop.f32.mrb[0].mxu0
        %1061 = vmatprep.mubr.bf16.mxu0 %v679
        %1062 = vmatmul.mubr.bf16.gmra.mrb[0].mxu0 %v678
        %v1063 = vpop.f32.mrb[0].mxu0
        %v1064 = vadd.f32 0.0, %v1063
        %v1065 = vpop.f32.mrb[0].mxu0
        %v1066 = vpop.f32.mrb[0].mxu0
        %v1067 = vadd.f32 0.0, %v1066
        %v1068 = vpop.f32.mrb[0].mxu0
        %1069 = vmatprep.mubr.bf16.mxu0 %v681
        %1070 = vmatmul.mubr.bf16.gmra.mrb[0].mxu0 %v680
        %v1071 = vpop.f32.mrb[0].mxu0
        %v1072 = vadd.f32 0.0, %v1071
        %v1073 = vpop.f32.mrb[0].mxu0
        %v1074 = vpop.f32.mrb[0].mxu0
        %v1075 = vadd.f32 0.0, %v1074
        %v1076 = vpop.f32.mrb[0].mxu0
        %1077 = vmatprep.mubr.bf16.mxu0 %v683
        %1078 = vmatmul.mubr.bf16.gmra.mrb[0].mxu0 %v682
        %v1079 = vpop.f32.mrb[0].mxu0
        %v1080 = vadd.f32 0.0, %v1079
        %v1081 = vpop.f32.mrb[0].mxu0
        %v1082 = vpop.f32.mrb[0].mxu0
        %v1083 = vadd.f32 0.0, %v1082
        %v1084 = vpop.f32.mrb[0].mxu0
        %1085 = vdwg.mxu0
        %v1086 = vld [vmem:[%s504] sm:$0xf]
        %v1087 = vld [vmem:[%s504 + $0x4] sm:$0xf]
        %v1088 = vld [vmem:[%s504 + $0x8] sm:$0xf]
        %v1089 = vld [vmem:[%s504 + $0xc] sm:$0xf]
        %v1090 = vld [vmem:[%s504 + $0x10] sm:$0xf]
        %v1091 = vld [vmem:[%s504 + $0x14] sm:$0xf]
        %v1092 = vld [vmem:[%s504 + $0x18] sm:$0xf]
        %v1093 = vld [vmem:[%s504 + $0x1c] sm:$0xf]
        %v1094 = vld [vmem:[%s504 + $0x20] sm:$0xf]
        %v1095 = vld [vmem:[%s504 + $0x24] sm:$0xf]
        %v1096 = vld [vmem:[%s504 + $0x28] sm:$0xf]
        %v1097 = vld [vmem:[%s504 + $0x2c] sm:$0xf]
        %v1098 = vld [vmem:[%s504 + $0x30] sm:$0xf]
        %v1099 = vld [vmem:[%s504 + $0x34] sm:$0xf]
        %v1100 = vld [vmem:[%s504 + $0x38] sm:$0xf]
        %v1101 = vld [vmem:[%s504 + $0x3c] sm:$0xf]
        %v1102 = vld [vmem:[%s504 + $0x40] sm:$0xf]
        %v1103 = vld [vmem:[%s504 + $0x44] sm:$0xf]
        %v1104 = vld [vmem:[%s504 + $0x48] sm:$0xf]
        %v1105 = vld [vmem:[%s504 + $0x4c] sm:$0xf]
        %v1106 = vld [vmem:[%s504 + $0x50] sm:$0xf]
        %v1107 = vld [vmem:[%s504 + $0x54] sm:$0xf]
        %v1108 = vld [vmem:[%s504 + $0x58] sm:$0xf]
        %v1109 = vld [vmem:[%s504 + $0x5c] sm:$0xf]
        %v1110 = vld [vmem:[%s504 + $0x60] sm:$0xf]
        %v1111 = vld [vmem:[%s504 + $0x64] sm:$0xf]
        %v1112 = vld [vmem:[%s504 + $0x68] sm:$0xf]
        %v1113 = vld [vmem:[%s504 + $0x6c] sm:$0xf]
        %v1114 = vld [vmem:[%s504 + $0x70] sm:$0xf]
        %v1115 = vld [vmem:[%s504 + $0x74] sm:$0xf]
        %v1116 = vld [vmem:[%s504 + $0x78] sm:$0xf]
        %v1117 = vld [vmem:[%s504 + $0x7c] sm:$0xf]
        %v1150 = vunpack.c.l.b16 %v1086
        %v1151 = vunpack.c.l.b16 %v1087
        %v1152 = vunpack.c.l.b16 %v1088
        %v1153 = vunpack.c.l.b16 %v1089
        %v1154 = vunpack.c.l.b16 %v1090
        %v1155 = vunpack.c.l.b16 %v1091
        %v1156 = vunpack.c.l.b16 %v1092
        %v1157 = vunpack.c.l.b16 %v1093
        %v1158 = vunpack.c.l.b16 %v1094
        %v1159 = vunpack.c.l.b16 %v1095
        %v1160 = vunpack.c.l.b16 %v1096
        %v1161 = vunpack.c.l.b16 %v1097
        %v1162 = vunpack.c.l.b16 %v1098
        %v1163 = vunpack.c.l.b16 %v1099
        %v1164 = vunpack.c.l.b16 %v1100
        %v1165 = vunpack.c.l.b16 %v1101
        %v1166 = vunpack.c.l.b16 %v1102
        %v1167 = vunpack.c.l.b16 %v1103
        %v1168 = vunpack.c.l.b16 %v1104
        %v1169 = vunpack.c.l.b16 %v1105
        %v1170 = vunpack.c.l.b16 %v1106
        %v1171 = vunpack.c.l.b16 %v1107
        %v1172 = vunpack.c.l.b16 %v1108
        %v1173 = vunpack.c.l.b16 %v1109
        %v1174 = vunpack.c.l.b16 %v1110
        %v1175 = vunpack.c.l.b16 %v1111
        %v1176 = vunpack.c.l.b16 %v1112
        %v1177 = vunpack.c.l.b16 %v1113
        %v1178 = vunpack.c.l.b16 %v1114
        %v1179 = vunpack.c.l.b16 %v1115
        %v1180 = vunpack.c.l.b16 %v1116
        %v1181 = vunpack.c.l.b16 %v1117
        %v1182 = vpack.c.b16 %v1151, %v1150
        %v1183 = vpack.c.b16 %v1153, %v1152
        %v1184 = vpack.c.b16 %v1155, %v1154
        %v1185 = vpack.c.b16 %v1157, %v1156
        %v1186 = vpack.c.b16 %v1159, %v1158
        %v1187 = vpack.c.b16 %v1161, %v1160
        %v1188 = vpack.c.b16 %v1163, %v1162
        %v1189 = vpack.c.b16 %v1165, %v1164
        %v1190 = vpack.c.b16 %v1167, %v1166
        %v1191 = vpack.c.b16 %v1169, %v1168
        %v1192 = vpack.c.b16 %v1171, %v1170
        %v1193 = vpack.c.b16 %v1173, %v1172
        %v1194 = vpack.c.b16 %v1175, %v1174
        %v1195 = vpack.c.b16 %v1177, %v1176
        %v1196 = vpack.c.b16 %v1179, %v1178
        %v1197 = vpack.c.b16 %v1181, %v1180
        %1214 = vmatprep.subr.bf16.mxu0 0
        %1215 = vmatpush1.bf16.msra.mxu0 %v1182
        %1216 = vmatprep.subr.bf16.mxu0 0
        %1217 = vmatpush1.bf16.msra.mxu0 %v1183
        %1218 = vmatprep.subr.bf16.mxu0 0
        %1219 = vmatpush1.bf16.msra.mxu0 %v1184
        %1220 = vmatprep.subr.bf16.mxu0 0
        %1221 = vmatpush1.bf16.msra.mxu0 %v1185
        %1222 = vmatprep.subr.bf16.mxu0 0
        %1223 = vmatpush1.bf16.msra.mxu0 %v1186
        %1224 = vmatprep.subr.bf16.mxu0 0
        %1225 = vmatpush1.bf16.msra.mxu0 %v1187
        %1226 = vmatprep.subr.bf16.mxu0 0
        %1227 = vmatpush1.bf16.msra.mxu0 %v1188
        %1228 = vmatprep.subr.bf16.mxu0 0
        %1229 = vmatpush1.bf16.msra.mxu0 %v1189
        %1230 = vmatprep.subr.bf16.mxu0 0
        %1231 = vmatpush1.bf16.msra.mxu0 %v1190
        %1232 = vmatprep.subr.bf16.mxu0 0
        %1233 = vmatpush1.bf16.msra.mxu0 %v1191
        %1234 = vmatprep.subr.bf16.mxu0 0
        %1235 = vmatpush1.bf16.msra.mxu0 %v1192
        %1236 = vmatprep.subr.bf16.mxu0 0
        %1237 = vmatpush1.bf16.msra.mxu0 %v1193
        %1238 = vmatprep.subr.bf16.mxu0 0
        %1239 = vmatpush1.bf16.msra.mxu0 %v1194
        %1240 = vmatprep.subr.bf16.mxu0 0
        %1241 = vmatpush1.bf16.msra.mxu0 %v1195
        %1242 = vmatprep.subr.bf16.mxu0 0
        %1243 = vmatpush1.bf16.msra.mxu0 %v1196
        %1244 = vmatprep.subr.bf16.mxu0 0
        %1245 = vmatpush1.bf16.msra.mxu0 %v1197
        %1246 = vmatprep.mubr.bf16.mxu0 %v677
        %1247 = vmatmul.mubr.bf16.gmra.mrb[0].mxu0 %v676
        %v1248 = vpop.f32.mrb[0].mxu0
        %v1249 = vadd.f32 0.0, %v1248
        %v1250 = vpop.f32.mrb[0].mxu0
        %v1251 = vpop.f32.mrb[0].mxu0
        %v1252 = vadd.f32 0.0, %v1251
        %v1253 = vpop.f32.mrb[0].mxu0
        %1254 = vmatprep.mubr.bf16.mxu0 %v679
        %1255 = vmatmul.mubr.bf16.gmra.mrb[0].mxu0 %v678
        %v1256 = vpop.f32.mrb[0].mxu0
        %v1257 = vadd.f32 0.0, %v1256
        %v1258 = vpop.f32.mrb[0].mxu0
        %v1259 = vpop.f32.mrb[0].mxu0
        %v1260 = vadd.f32 0.0, %v1259
        %v1261 = vpop.f32.mrb[0].mxu0
        %1262 = vmatprep.mubr.bf16.mxu0 %v681
        %1263 = vmatmul.mubr.bf16.gmra.mrb[0].mxu0 %v680
        %v1264 = vpop.f32.mrb[0].mxu0
        %v1265 = vadd.f32 0.0, %v1264
        %v1266 = vpop.f32.mrb[0].mxu0
        %v1267 = vpop.f32.mrb[0].mxu0
        %v1268 = vadd.f32 0.0, %v1267
        %v1269 = vpop.f32.mrb[0].mxu0
        %1270 = vmatprep.mubr.bf16.mxu0 %v683
        %1271 = vmatmul.mubr.bf16.gmra.mrb[0].mxu0 %v682
        %v1272 = vpop.f32.mrb[0].mxu0
        %v1273 = vadd.f32 0.0, %v1272
        %v1274 = vpop.f32.mrb[0].mxu0
        %v1275 = vpop.f32.mrb[0].mxu0
        %v1276 = vadd.f32 0.0, %v1275
        %v1277 = vpop.f32.mrb[0].mxu0
        %1278 = vdwg.mxu0
        %v1279 = vmul.f32 %v863, %v684
        %v1280 = vmul.f32 %v866, %v685
        %v1281 = vmul.f32 %v871, %v686
        %v1282 = vmul.f32 %v874, %v687
        %v1283 = vmul.f32 %v879, %v688
        %v1284 = vmul.f32 %v882, %v689
        %v1285 = vmul.f32 %v887, %v690
        %v1286 = vmul.f32 %v890, %v691
        %1287 = vrot.lane.b32.xlu0 %v863, 64
        %v1288 = vpop.permute.xlu0 %1287
        %1289 = vrot.lane.b32.xlu0 %v866, 64
        %v1290 = vpop.permute.xlu0 %1289
        %1291 = vrot.lane.b32.xlu0 %v871, 64
        %v1292 = vpop.permute.xlu0 %1291
        %1293 = vrot.lane.b32.xlu0 %v874, 64
        %v1294 = vpop.permute.xlu0 %1293
        %1295 = vrot.lane.b32.xlu0 %v879, 64
        %v1296 = vpop.permute.xlu0 %1295
        %1297 = vrot.lane.b32.xlu0 %v882, 64
        %v1298 = vpop.permute.xlu0 %1297
        %1299 = vrot.lane.b32.xlu0 %v887, 64
        %v1300 = vpop.permute.xlu0 %1299
        %1301 = vrot.lane.b32.xlu0 %v890, 64
        %v1302 = vpop.permute.xlu0 %1301
        %v1303 = vmul.f32 %v1288, %v692
        %v1304 = vmul.f32 %v1290, %v693
        %v1305 = vmul.f32 %v1292, %v694
        %v1306 = vmul.f32 %v1294, %v695
        %v1307 = vmul.f32 %v1296, %v696
        %v1308 = vmul.f32 %v1298, %v697
        %v1309 = vmul.f32 %v1300, %v698
        %v1310 = vmul.f32 %v1302, %v699
        %v1311 = vadd.f32 %v1279, %v1303
        %v1312 = vadd.f32 %v1280, %v1304
        %v1313 = vadd.f32 %v1281, %v1305
        %v1314 = vadd.f32 %v1282, %v1306
        %v1315 = vadd.f32 %v1283, %v1307
        %v1316 = vadd.f32 %v1284, %v1308
        %v1317 = vadd.f32 %v1285, %v1309
        %v1318 = vadd.f32 %v1286, %v1310
        %v1319 = vmul.f32 %v1056, %v684
        %v1320 = vmul.f32 %v1059, %v685
        %v1321 = vmul.f32 %v1064, %v686
        %v1322 = vmul.f32 %v1067, %v687
        %v1323 = vmul.f32 %v1072, %v688
        %v1324 = vmul.f32 %v1075, %v689
        %v1325 = vmul.f32 %v1080, %v690
        %v1326 = vmul.f32 %v1083, %v691
        %1327 = vrot.lane.b32.xlu0 %v1056, 64
        %v1328 = vpop.permute.xlu0 %1327
        %1329 = vrot.lane.b32.xlu0 %v1059, 64
        %v1330 = vpop.permute.xlu0 %1329
        %1331 = vrot.lane.b32.xlu0 %v1064, 64
        %v1332 = vpop.permute.xlu0 %1331
        %1333 = vrot.lane.b32.xlu0 %v1067, 64
        %v1334 = vpop.permute.xlu0 %1333
        %1335 = vrot.lane.b32.xlu0 %v1072, 64
        %v1336 = vpop.permute.xlu0 %1335
        %1337 = vrot.lane.b32.xlu0 %v1075, 64
        %v1338 = vpop.permute.xlu0 %1337
        %1339 = vrot.lane.b32.xlu0 %v1080, 64
        %v1340 = vpop.permute.xlu0 %1339
        %1341 = vrot.lane.b32.xlu0 %v1083, 64
        %v1342 = vpop.permute.xlu0 %1341
        %v1343 = vmul.f32 %v1328, %v692
        %v1344 = vmul.f32 %v1330, %v693
        %v1345 = vmul.f32 %v1332, %v694
        %v1346 = vmul.f32 %v1334, %v695
        %v1347 = vmul.f32 %v1336, %v696
        %v1348 = vmul.f32 %v1338, %v697
        %v1349 = vmul.f32 %v1340, %v698
        %v1350 = vmul.f32 %v1342, %v699
        %v1351 = vadd.f32 %v1319, %v1343
        %v1352 = vadd.f32 %v1320, %v1344
        %v1353 = vadd.f32 %v1321, %v1345
        %v1354 = vadd.f32 %v1322, %v1346
        %v1355 = vadd.f32 %v1323, %v1347
        %v1356 = vadd.f32 %v1324, %v1348
        %v1357 = vadd.f32 %v1325, %v1349
        %v1358 = vadd.f32 %v1326, %v1350
        %v1359 = vpack.c.bf16 %v1312, %v1311
        %v1360 = vpack.c.bf16 %v1314, %v1313
        %v1361 = vpack.c.bf16 %v1316, %v1315
        %v1362 = vpack.c.bf16 %v1318, %v1317
        %v1367 = vunpack.c.l.b16 %v1359
        %v1368 = vunpack.c.h.b16 %v1359
        %v1369 = vunpack.c.l.b16 %v1360
        %v1370 = vunpack.c.h.b16 %v1360
        %v1371 = vunpack.c.l.b16 %v1361
        %v1372 = vunpack.c.h.b16 %v1361
        %v1373 = vunpack.c.l.b16 %v1362
        %v1374 = vunpack.c.h.b16 %v1362
        %v1375 = vpack.c.b16 %v1367, %v1367
        %v1376 = vpack.c.b16 %v1368, %v1368
        %v1377 = vpack.c.b16 %v1369, %v1369
        %v1378 = vpack.c.b16 %v1370, %v1370
        %v1379 = vpack.c.b16 %v1371, %v1371
        %v1380 = vpack.c.b16 %v1372, %v1372
        %v1381 = vpack.c.b16 %v1373, %v1373
        %v1382 = vpack.c.b16 %v1374, %v1374
        %1391 = vst [vmem:[%s557] sm:$0xf] %v1375
        %1392 = vst [vmem:[%s557 + $0x4] sm:$0xf] %v1376
        %1393 = vst [vmem:[%s557 + $0x8] sm:$0xf] %v1377
        %1394 = vst [vmem:[%s557 + $0xc] sm:$0xf] %v1378
        %1395 = vst [vmem:[%s557 + $0x10] sm:$0xf] %v1379
        %1396 = vst [vmem:[%s557 + $0x14] sm:$0xf] %v1380
        %1397 = vst [vmem:[%s557 + $0x18] sm:$0xf] %v1381
        %1398 = vst [vmem:[%s557 + $0x1c] sm:$0xf] %v1382
        %v1399 = vpack.c.bf16 %v1352, %v1351
        %v1400 = vpack.c.bf16 %v1354, %v1353
        %v1401 = vpack.c.bf16 %v1356, %v1355
        %v1402 = vpack.c.bf16 %v1358, %v1357
        %v1407 = vunpack.c.l.b16 %v1399
        %v1408 = vunpack.c.h.b16 %v1399
        %v1409 = vunpack.c.l.b16 %v1400
        %v1410 = vunpack.c.h.b16 %v1400
        %v1411 = vunpack.c.l.b16 %v1401
        %v1412 = vunpack.c.h.b16 %v1401
        %v1413 = vunpack.c.l.b16 %v1402
        %v1414 = vunpack.c.h.b16 %v1402
        %v1415 = vpack.c.b16 %v1407, %v1407
        %v1416 = vpack.c.b16 %v1408, %v1408
        %v1417 = vpack.c.b16 %v1409, %v1409
        %v1418 = vpack.c.b16 %v1410, %v1410
        %v1419 = vpack.c.b16 %v1411, %v1411
        %v1420 = vpack.c.b16 %v1412, %v1412
        %v1421 = vpack.c.b16 %v1413, %v1413
        %v1422 = vpack.c.b16 %v1414, %v1414
        %1431 = vst [vmem:[%s564] sm:$0xf] %v1415
        %1432 = vst [vmem:[%s564 + $0x4] sm:$0xf] %v1416
        %1433 = vst [vmem:[%s564 + $0x8] sm:$0xf] %v1417
        %1434 = vst [vmem:[%s564 + $0xc] sm:$0xf] %v1418
        %1435 = vst [vmem:[%s564 + $0x10] sm:$0xf] %v1419
        %1436 = vst [vmem:[%s564 + $0x14] sm:$0xf] %v1420
        %1437 = vst [vmem:[%s564 + $0x18] sm:$0xf] %v1421
        %1438 = vst [vmem:[%s564 + $0x1c] sm:$0xf] %v1422
        %v1439 = vpack.c.bf16 %v1252, %v1249
        %v1440 = vpack.c.bf16 %v1260, %v1257
        %v1441 = vpack.c.bf16 %v1268, %v1265
        %v1442 = vpack.c.bf16 %v1276, %v1273
        %v1447 = vunpack.c.l.b16 %v1439
        %v1448 = vunpack.c.h.b16 %v1439
        %v1449 = vunpack.c.l.b16 %v1440
        %v1450 = vunpack.c.h.b16 %v1440
        %v1451 = vunpack.c.l.b16 %v1441
        %v1452 = vunpack.c.h.b16 %v1441
        %v1453 = vunpack.c.l.b16 %v1442
        %v1454 = vunpack.c.h.b16 %v1442
        %v1455 = vpack.c.b16 %v1447, %v1447
        %v1456 = vpack.c.b16 %v1448, %v1448
        %v1457 = vpack.c.b16 %v1449, %v1449
        %v1458 = vpack.c.b16 %v1450, %v1450
        %v1459 = vpack.c.b16 %v1451, %v1451
        %v1460 = vpack.c.b16 %v1452, %v1452
        %v1461 = vpack.c.b16 %v1453, %v1453
        %v1462 = vpack.c.b16 %v1454, %v1454
        %1471 = vst [vmem:[%s571] sm:$0xf] %v1455
        %1472 = vst [vmem:[%s571 + $0x4] sm:$0xf] %v1456
        %1473 = vst [vmem:[%s571 + $0x8] sm:$0xf] %v1457
        %1474 = vst [vmem:[%s571 + $0xc] sm:$0xf] %v1458
        %1475 = vst [vmem:[%s571 + $0x10] sm:$0xf] %v1459
        %1476 = vst [vmem:[%s571 + $0x14] sm:$0xf] %v1460
        %1477 = vst [vmem:[%s571 + $0x18] sm:$0xf] %v1461
        %1478 = vst [vmem:[%s571 + $0x1c] sm:$0xf] %v1462
        %s1479 = sand.u32 %s227, 1
        %s1480 = scalar_lea.sflag [#allocation4], %s1479
        %s1481 = sand.u32 %s227, 1
        %s1482 = smul.addr %s1481, 32
        %s1483 = scalar_lea.vmem [#allocation13], %s1482
        %s1484 = sand.u32 %s38, 1
        %s1485 = scalar_lea.sflag [#allocation15], %s1484
        %s1486 = sand.u32 %s257, 1
        %s1487 = smul.addr %s1486, 32
        %s1488 = scalar_lea.vmem [#allocation14], %s1487
        %s1489 = sand.u32 %s38, 1
        %s1490 = scalar_lea.sflag [#allocation15], %s1489
        %s1491 = sand.u32 %s287, 1
        %s1492 = smul.addr %s1491, 32
        %s1493 = scalar_lea.vmem [#allocation16], %s1492
        // Predicated region
        $region69: #{tpu_custom_call.1} parent=43 // pred_check
          %p1494 = pneg %p237
        $region70: #{tpu_custom_call.1} parent=43 // pred_check_branch
          %1496 = sbr.rel (%p1494) target = $region72
        $region71: #{tpu_custom_call.1} parent=43 // pred_region
          %s1497 = smul.u32 8, %s44
          %s1499 = ssub.s32 512, 512
          %1500 = vsyncadd %s1480, %s1499
          %s1501 = smul.addr %s45, 16
          %s1502 = sadd.s32 %s1497, %s1501
          %s1503 = smul.addr %s43, 32
          %s1504 = sadd.s32 %s1502, %s1503
          %s1505 = smul.addr %s1504, 64
          %s1506 = scalar_lea.hbm %s6, %s1505
          %s1507 = sshll.u32 %s1483, 4
          %s1508 = int_to_ptr.vmem [resolvable:$true] %s1507
          %1513 = dma.vmem_to_hbm [thread:$0]  %s1508, 512, %s1506, %s1480, 64, 64, 4
        $region72: #{tpu_custom_call.1} parent=43 // pred_fallthru
          _
        // Predicated region
        $region73: #{tpu_custom_call.1} parent=43 // pred_check
          %p1514 = pneg %p267
        $region74: #{tpu_custom_call.1} parent=43 // pred_check_branch
          %1516 = sbr.rel (%p1514) target = $region76
        $region75: #{tpu_custom_call.1} parent=43 // pred_region
          %s1517 = smul.u32 8, %s44
          %s1519 = ssub.s32 512, 512
          %1520 = vsyncadd %s1485, %s1519
          %s1521 = smul.addr %s45, 16
          %s1522 = sadd.s32 %s1517, %s1521
          %s1523 = smul.addr %s43, 32
          %s1524 = sadd.s32 %s1522, %s1523
          %s1525 = smul.addr %s1524, 64
          %s1526 = scalar_lea.hbm %s7, %s1525
          %s1527 = sshll.u32 %s1488, 4
          %s1528 = int_to_ptr.vmem [resolvable:$true] %s1527
          %1533 = dma.vmem_to_hbm [thread:$0]  %s1528, 512, %s1526, %s1485, 64, 64, 4
        $region76: #{tpu_custom_call.1} parent=43 // pred_fallthru
          _
        // Predicated region
        $region77: #{tpu_custom_call.1} parent=43 // pred_check
          %p1534 = pneg %p297
        $region78: #{tpu_custom_call.1} parent=43 // pred_check_branch
          %1536 = sbr.rel (%p1534) target = $region80
        $region79: #{tpu_custom_call.1} parent=43 // pred_region
          %s1537 = smul.u32 8, %s44
          %s1539 = ssub.s32 512, 512
          %1540 = vsyncadd %s1490, %s1539
          %s1541 = smul.addr %s45, 16
          %s1542 = sadd.s32 %s1537, %s1541
          %s1543 = smul.addr %s43, 32
          %s1544 = sadd.s32 %s1542, %s1543
          %s1545 = smul.addr %s1544, 64
          %s1546 = scalar_lea.hbm %s8, %s1545
          %s1547 = sshll.u32 %s1493, 4
          %s1548 = int_to_ptr.vmem [resolvable:$true] %s1547
          %1553 = dma.vmem_to_hbm [thread:$0]  %s1548, 512, %s1546, %s1490, 64, 64, 4
        $region80: #{tpu_custom_call.1} parent=43 // pred_fallthru
          _
      $region44: #{tpu_custom_call.1} parent=5 // pred_fallthru
        _
      %p1554 = scmp.le.s32.totalorder 2, %s33
      // Predicated region
      $region81: #{tpu_custom_call.1} parent=5 // pred_check
        %p1555 = pneg %p1554
      $region82: #{tpu_custom_call.1} parent=5 // pred_check_branch
        %1557 = sbr.rel (%p1555) target = $region84
      $region83: #{tpu_custom_call.1} parent=5 // pred_region
        %s1558 = ssub.s32 %s33, 2
        // Predicated region
        $region85: #{tpu_custom_call.1} parent=83 // pred_check
          %p1559 = pneg %p243
        $region86: #{tpu_custom_call.1} parent=83 // pred_check_branch
          %1561 = sbr.rel (%p1559) target = $region88
        $region87: #{tpu_custom_call.1} parent=83 // pred_region
          %s1562 = sand.u32 %s228, 1
          %s1563 = scalar_lea.sflag [#allocation4], %s1562
          %s1564 = sand.u32 %s228, 1
          %s1565 = smul.addr %s1564, 32
          %s1566 = scalar_lea.vmem [#allocation13], %s1565
          %1567 = dma.done %s1563, 512
        $region88: #{tpu_custom_call.1} parent=83 // pred_fallthru
          _
        // Predicated region
        $region89: #{tpu_custom_call.1} parent=83 // pred_check
          %p1568 = pneg %p273
        $region90: #{tpu_custom_call.1} parent=83 // pred_check_branch
          %1570 = sbr.rel (%p1568) target = $region92
        $region91: #{tpu_custom_call.1} parent=83 // pred_region
          %s1571 = sand.u32 %s39, 1
          %s1572 = scalar_lea.sflag [#allocation15], %s1571
          %s1573 = sand.u32 %s258, 1
          %s1574 = smul.addr %s1573, 32
          %s1575 = scalar_lea.vmem [#allocation14], %s1574
          %1576 = dma.done %s1572, 512
        $region92: #{tpu_custom_call.1} parent=83 // pred_fallthru
          _
        // Predicated region
        $region93: #{tpu_custom_call.1} parent=83 // pred_check
          %p1577 = pneg %p303
        $region94: #{tpu_custom_call.1} parent=83 // pred_check_branch
          %1579 = sbr.rel (%p1577) target = $region96
        $region95: #{tpu_custom_call.1} parent=83 // pred_region
          %s1580 = sand.u32 %s39, 1
          %s1581 = scalar_lea.sflag [#allocation15], %s1580
          %s1582 = sand.u32 %s288, 1
          %s1583 = smul.addr %s1582, 32
          %s1584 = scalar_lea.vmem [#allocation16], %s1583
          %1585 = dma.done %s1581, 512
        $region96: #{tpu_custom_call.1} parent=83 // pred_fallthru
          _
      $region84: #{tpu_custom_call.1} parent=5 // pred_fallthru
        _
    $region6: #{tpu_custom_call.1} parent=1 // loop_footer
      %s37 = sadd.s32 1, %s33
    $region7: #{tpu_custom_call.1} parent=1 // loop_footer_branch
      %32 = sbr.rel target = $region3
    $region8: #{tpu_custom_call.1} parent=1 // loop_exit
      _
    %1586 = vsyncpa [#allocation3], 1
    %s1587 = scalar_lea.sflag [#allocation3], 1
    %1588 = vsyncpa %s1587, 1
    %1589 = vsyncpa [#allocation6], 1
    %s1590 = scalar_lea.sflag [#allocation6], 1
    %1591 = vsyncpa %s1590, 1
    %1592 = vsyncpa [#allocation9], 1
    %s1593 = scalar_lea.sflag [#allocation9], 1
    %1594 = vsyncpa %s1593, 1
    %1595 = vsyncpa [#allocation12], 1
    %s1596 = scalar_lea.sflag [#allocation12], 1
    %1597 = vsyncpa %s1596, 1
    %1598 = vsyncpa [#allocation4], 1
    %s1599 = scalar_lea.sflag [#allocation4], 1
    %1600 = vsyncpa %s1599, 1
    %1601 = vsyncpa [#allocation15], 1
    %s1602 = scalar_lea.sflag [#allocation15], 1
    %1603 = vsyncpa %s1602, 1

</llo_original>
